<compile_context>
chip_gen: v6e
topology: v6e:2x2x1
jax: 0.10.0
libtpu: 0.0.40
codegen_flags: <defaults>
</compile_context>

<pallas_src>
import jax
import jax.numpy as jnp
from jax.experimental import pallas as pl
from jax.experimental.pallas import tpu as pltpu


# ----------------------------------------------------------------------------
# Kernel 1: hidden representation h for a tile of TM node rows
#   h = relu( [relu(A_f @ XWf + bf) | relu(A_r @ XWu + bu)] @ Wfc + bfc )
# ----------------------------------------------------------------------------
def fault_gnn_hidden_kernel(x_ref, wcat_ref, bf_ref, bu_ref, wfc_ref, bfc_ref,
                            a_fwd_ref, a_rev_ref, h_ref):
    hdim = bf_ref.shape[1]

    # Fused input projection X @ [Wf | Wu]  (tiny: F=4 contraction; recomputed per tile
    # so the row-tile grid axis stays dependency-free and can be marked "parallel").
    xw = jnp.dot(x_ref[...], wcat_ref[...], preferred_element_type=jnp.float32)
    xw = xw.astype(jnp.bfloat16)
    xwf = xw[:, :hdim]
    xwu = xw[:, hdim:]

    # Message passing: bf16 MXU operands, f32 accumulation / elementwise.
    hf = jnp.dot(a_fwd_ref[...], xwf, preferred_element_type=jnp.float32) + bf_ref[...]
    hu = jnp.dot(a_rev_ref[...], xwu, preferred_element_type=jnp.float32) + bu_ref[...]
    hf = jnp.maximum(hf, 0.0)
    hu = jnp.maximum(hu, 0.0)
    # dropout(0.5): identity in eval mode.

    # Fused fc: concat([hf, hu], axis=1) @ Wfc + bfc as one (TM, 2H) @ (2H, H) matmul.
    hcat = jnp.concatenate([hf, hu], axis=1).astype(jnp.bfloat16)
    h = jnp.dot(hcat, wfc_ref[...], preferred_element_type=jnp.float32) + bfc_ref[...]
    h_ref[...] = jnp.maximum(h, 0.0).astype(h_ref.dtype)


# ----------------------------------------------------------------------------
# Kernel 2: output layer for a tile of TM node rows
#   out = sigmoid( (A_f @ h) @ w_out + b_out )      (reassociated final GCNConv)
# ----------------------------------------------------------------------------
def fault_gnn_out_kernel(h_ref, wout_ref, bout_ref, a_fwd_ref, out_ref):
    agg = jnp.dot(a_fwd_ref[...], h_ref[...], preferred_element_type=jnp.float32)
    # (H -> 1) projection as broadcast-multiply + lane reduction (wout stored as (1, H)).
    logits = jnp.sum(agg * wout_ref[...], axis=1, keepdims=True) + bout_ref[...]
    out_ref[...] = jax.nn.sigmoid(logits)


# ----------------------------------------------------------------------------
# Graph preprocessing (done once per graph, hoisted out of the forward path)
# ----------------------------------------------------------------------------
def _round_up(x, m):
    return ((x + m - 1) // m) * m


def _gcn_norm_dense(edge_index, num_nodes):
    """Dense D^-1/2 (A + I) D^-1/2 with aggregation out[i] = sum_{j->i} x[j].

    Uses add-REMAINING-self-loops semantics (PyG gcn_norm): the diagonal is only
    incremented for nodes that have no explicit self loop in edge_index.
    """
    src, dst = edge_index[0], edge_index[1]
    a = jnp.zeros((num_nodes, num_nodes), jnp.float32).at[dst, src].add(1.0)
    diag = jnp.diagonal(a)
    a = a + jnp.diag(jnp.where(diag > 0, 0.0, 1.0))
    deg = a.sum(axis=1)
    d_inv_sqrt = jnp.where(deg > 0, 1.0 / jnp.sqrt(deg), 0.0)
    return d_inv_sqrt[:, None] * a * d_inv_sqrt[None, :]


def preprocess_graph(edge_index, num_nodes):
    """Build both padded bf16 normalized adjacencies once; reuse across forward calls."""
    n_pad = _round_up(max(num_nodes, 1), 128)
    a_fwd = _gcn_norm_dense(edge_index, num_nodes)
    rev = jnp.stack([edge_index[1], edge_index[0]], axis=0)
    a_rev = _gcn_norm_dense(rev, num_nodes)
    pad = ((0, n_pad - num_nodes), (0, n_pad - num_nodes))
    return (jnp.pad(a_fwd, pad).astype(jnp.bfloat16),
            jnp.pad(a_rev, pad).astype(jnp.bfloat16))


# ----------------------------------------------------------------------------
# Forward pass
# ----------------------------------------------------------------------------
def fault_gnn_forward(x, a_fwd_pad, a_rev_pad, params):
    n, f = x.shape
    n_pad = a_fwd_pad.shape[0]
    hdim = params["bfc"].shape[1]

    tm = 256 if n_pad % 256 == 0 else 128
    n_tiles = n_pad // tm
    const = lambda i: (0, 0)
    row_tile = lambda i: (i, 0)

    x_pad = jnp.pad(x, ((0, n_pad - n), (0, 0))).astype(jnp.bfloat16)

    compiler_params = pltpu.CompilerParams(
        dimension_semantics=("parallel",),
        vmem_limit_bytes=32 * 1024 * 1024,
    )

    # ---- kernel 1: hidden features h (N_pad, H) in bf16 ----
    flops1 = (2 * n_pad * f * 2 * hdim * n_tiles      # fused projection (per tile)
              + 2 * 2 * n_pad * n_pad * hdim          # two aggregations
              + 2 * n_pad * 2 * hdim * hdim)          # fused fc
    bytes1 = (2 * n_pad * n_pad * 2                   # two bf16 adjacencies
              + n_pad * f * 2 + n_pad * hdim * 2
              + (f * 2 * hdim + 2 * hdim * hdim + 3 * hdim) * 4)
    h = pl.pallas_call(
        fault_gnn_hidden_kernel,
        out_shape=jax.ShapeDtypeStruct((n_pad, hdim), jnp.bfloat16),
        grid_spec=pltpu.PrefetchScalarGridSpec(
            num_scalar_prefetch=0,
            grid=(n_tiles,),
            in_specs=[
                pl.BlockSpec((n_pad, f), const),          # x (resident)
                pl.BlockSpec((f, 2 * hdim), const),       # [Wf | Wu]
                pl.BlockSpec((1, hdim), const),           # bf
                pl.BlockSpec((1, hdim), const),           # bu
                pl.BlockSpec((2 * hdim, hdim), const),    # Wfc
                pl.BlockSpec((1, hdim), const),           # bfc
                pl.BlockSpec((tm, n_pad), row_tile),      # A_fwd row tile
                pl.BlockSpec((tm, n_pad), row_tile),      # A_rev row tile
            ],
            out_specs=pl.BlockSpec((tm, hdim), row_tile),
        ),
        compiler_params=compiler_params,
        cost_estimate=pl.CostEstimate(flops=flops1, transcendentals=0,
                                      bytes_accessed=bytes1),
    )(x_pad, params["wcat"], params["bf"], params["bu"],
      params["wfc"], params["bfc"], a_fwd_pad, a_rev_pad)

    # ---- kernel 2: out = sigmoid((A_f @ h) @ w_out + b_out) ----
    flops2 = 2 * n_pad * n_pad * hdim + 2 * n_pad * hdim
    bytes2 = n_pad * n_pad * 2 + n_pad * hdim * 2 + n_pad * 4 + hdim * 4
    out_pad = pl.pallas_call(
        fault_gnn_out_kernel,
        out_shape=jax.ShapeDtypeStruct((n_pad, 1), jnp.float32),
        grid_spec=pltpu.PrefetchScalarGridSpec(
            num_scalar_prefetch=0,
            grid=(n_tiles,),
            in_specs=[
                pl.BlockSpec((n_pad, hdim), const),       # h (resident)
                pl.BlockSpec((1, hdim), const),           # w_out^T, lane-dense
                pl.BlockSpec((1, 1), const),              # b_out
                pl.BlockSpec((tm, n_pad), row_tile),      # A_fwd row tile
            ],
            out_specs=pl.BlockSpec((tm, 1), row_tile),
        ),
        compiler_params=compiler_params,
        cost_estimate=pl.CostEstimate(flops=flops2, transcendentals=n_pad,
                                      bytes_accessed=bytes2),
    )(h, params["wout"], params["bout"], a_fwd_pad)

    return out_pad[:n]


# ----------------------------------------------------------------------------
# Parameter construction (matches FaultGNN(in_dim=4, hidden_dim=64))
# ----------------------------------------------------------------------------
def init_params(key, in_dim=4, hidden_dim=64):
    ks = jax.random.split(key, 8)
    s = 0.1
    wf = s * jax.random.normal(ks[0], (in_dim, hidden_dim), jnp.float32)
    wu = s * jax.random.normal(ks[1], (in_dim, hidden_dim), jnp.float32)
    wfc1 = s * jax.random.normal(ks[2], (hidden_dim, hidden_dim), jnp.float32)
    wfc2 = s * jax.random.normal(ks[3], (hidden_dim, hidden_dim), jnp.float32)
    return {
        # fused input projection: X @ [Wf | Wu]  -> (F, 2H), bf16 for the MXU
        "wcat": jnp.concatenate([wf, wu], axis=1).astype(jnp.bfloat16),
        "bf": s * jax.random.normal(ks[4], (1, hidden_dim), jnp.float32),
        "bu": s * jax.random.normal(ks[5], (1, hidden_dim), jnp.float32),
        # fused fc on concat([h_forward, h_upstream]) -> (2H, H), bf16
        "wfc": jnp.concatenate([wfc1, wfc2], axis=0).astype(jnp.bfloat16),
        "bfc": s * jax.random.normal(ks[6], (1, hidden_dim), jnp.float32),
        # conv_out weight stored transposed (1, H) so the H->1 step is a lane reduction
        "wout": s * jax.random.normal(ks[7], (1, hidden_dim), jnp.float32),
        "bout": jnp.zeros((1, 1), jnp.float32),
    }


if __name__ == "__main__":
    key = jax.random.PRNGKey(0)
    k_x, k_e, k_p = jax.random.split(key, 3)

    num_nodes = 16
    in_dim = 4
    hidden_dim = 64
    num_edges = 32

    x = jax.random.normal(k_x, (num_nodes, in_dim), jnp.float32)
    edge_index = jax.random.randint(k_e, (2, num_edges), 0, num_nodes, jnp.int32)
    params = init_params(k_p, in_dim=in_dim, hidden_dim=hidden_dim)

    # Graph preprocessing (normalized adjacencies) is hoisted: built once, reused.
    a_fwd_pad, a_rev_pad = preprocess_graph(edge_index, num_nodes)

    fwd = jax.jit(fault_gnn_forward)
    out = fwd(x, a_fwd_pad, a_rev_pad, params)
    out = jax.block_until_ready(out)

    assert out.shape == (num_nodes, 1)
    assert bool(jnp.all((out >= 0.0) & (out <= 1.0)))
    print("KERNEL_OK")
</pallas_src>

<mosaic_0001>
module attributes {stable_mosaic.version = 11 : i64} {
  func.func @fault_gnn_hidden_kernel(%arg0: i32, %arg1: memref<128x4xbf16, #tpu.memory_space<vmem>>, %arg2: memref<4x128xbf16, #tpu.memory_space<vmem>>, %arg3: memref<1x64xf32, #tpu.memory_space<vmem>>, %arg4: memref<1x64xf32, #tpu.memory_space<vmem>>, %arg5: memref<128x64xbf16, #tpu.memory_space<vmem>>, %arg6: memref<1x64xf32, #tpu.memory_space<vmem>>, %arg7: memref<128x128xbf16, #tpu.memory_space<vmem>>, %arg8: memref<128x128xbf16, #tpu.memory_space<vmem>>, %arg9: memref<128x64xbf16, #tpu.memory_space<vmem>>) attributes {dimension_semantics = [#tpu.dimension_semantics<parallel>], iteration_bounds = array<i64: 1>, scalar_prefetch = 0 : i64, scratch_operands = 0 : i64, tpu.core_type = #tpu.core_type<tc>, window_params = [{pipeline_mode = #tpu.pipeline_mode<synchronous>, transform_indices = @transform_0, window_bounds = array<i64: 128, 4>}, {pipeline_mode = #tpu.pipeline_mode<synchronous>, transform_indices = @transform_1, window_bounds = array<i64: 4, 128>}, {pipeline_mode = #tpu.pipeline_mode<synchronous>, transform_indices = @transform_2, window_bounds = array<i64: 1, 64>}, {pipeline_mode = #tpu.pipeline_mode<synchronous>, transform_indices = @transform_3, window_bounds = array<i64: 1, 64>}, {pipeline_mode = #tpu.pipeline_mode<synchronous>, transform_indices = @transform_4, window_bounds = array<i64: 128, 64>}, {pipeline_mode = #tpu.pipeline_mode<synchronous>, transform_indices = @transform_5, window_bounds = array<i64: 1, 64>}, {transform_indices = @transform_6, window_bounds = array<i64: 128, 128>}, {transform_indices = @transform_7, window_bounds = array<i64: 128, 128>}, {transform_indices = @transform_8, window_bounds = array<i64: 128, 64>}]} {
    %c0 = arith.constant 0 : index
    %c0_0 = arith.constant 0 : index
    %0 = vector.load %arg1[%c0, %c0_0] : memref<128x4xbf16, #tpu.memory_space<vmem>>, vector<128x4xbf16>
    %c0_1 = arith.constant 0 : index
    %c0_2 = arith.constant 0 : index
    %1 = vector.load %arg2[%c0_1, %c0_2] : memref<4x128xbf16, #tpu.memory_space<vmem>>, vector<4x128xbf16>
    %cst = arith.constant dense<0.000000e+00> : vector<128x128xf32>
    %2 = tpu.matmul %0, %1, %cst {dimension_numbers = #tpu.dot_dimension_numbers<[1], [0], [0], [1], [0, 0, 1, 1], [], []>} : vector<128x4xbf16>, vector<4x128xbf16>, vector<128x128xf32> -> vector<128x128xf32>
    %3 = arith.truncf %2 : vector<128x128xf32> to vector<128x128xbf16>
    %4 = vector.extract_strided_slice %3 {offsets = [0, 0], sizes = [128, 64], strides = [1, 1]} : vector<128x128xbf16> to vector<128x64xbf16>
    %5 = vector.extract_strided_slice %3 {offsets = [0, 64], sizes = [128, 64], strides = [1, 1]} : vector<128x128xbf16> to vector<128x64xbf16>
    %c0_3 = arith.constant 0 : index
    %c0_4 = arith.constant 0 : index
    %6 = vector.load %arg7[%c0_3, %c0_4] : memref<128x128xbf16, #tpu.memory_space<vmem>>, vector<128x128xbf16>
    %cst_5 = arith.constant dense<0.000000e+00> : vector<128x64xf32>
    %7 = tpu.matmul %6, %4, %cst_5 {dimension_numbers = #tpu.dot_dimension_numbers<[1], [0], [0], [1], [0, 0, 1, 1], [], []>} : vector<128x128xbf16>, vector<128x64xbf16>, vector<128x64xf32> -> vector<128x64xf32>
    %c0_6 = arith.constant 0 : index
    %c0_7 = arith.constant 0 : index
    %8 = vector.load %arg3[%c0_6, %c0_7] : memref<1x64xf32, #tpu.memory_space<vmem>>, vector<1x64xf32>
    %9 = vector.broadcast %8 : vector<1x64xf32> to vector<128x64xf32>
    %10 = arith.addf %7, %9 : vector<128x64xf32>
    %c0_8 = arith.constant 0 : index
    %c0_9 = arith.constant 0 : index
    %11 = vector.load %arg8[%c0_8, %c0_9] : memref<128x128xbf16, #tpu.memory_space<vmem>>, vector<128x128xbf16>
    %cst_10 = arith.constant dense<0.000000e+00> : vector<128x64xf32>
    %12 = tpu.matmul %11, %5, %cst_10 {dimension_numbers = #tpu.dot_dimension_numbers<[1], [0], [0], [1], [0, 0, 1, 1], [], []>} : vector<128x128xbf16>, vector<128x64xbf16>, vector<128x64xf32> -> vector<128x64xf32>
    %c0_11 = arith.constant 0 : index
    %c0_12 = arith.constant 0 : index
    %13 = vector.load %arg4[%c0_11, %c0_12] : memref<1x64xf32, #tpu.memory_space<vmem>>, vector<1x64xf32>
    %14 = vector.broadcast %13 : vector<1x64xf32> to vector<128x64xf32>
    %15 = arith.addf %12, %14 : vector<128x64xf32>
    %cst_13 = arith.constant 0.000000e+00 : f32
    %16 = vector.broadcast %cst_13 : f32 to vector<128x64xf32>
    %17 = arith.maximumf %10, %16 : vector<128x64xf32>
    %cst_14 = arith.constant 0.000000e+00 : f32
    %18 = vector.broadcast %cst_14 : f32 to vector<128x64xf32>
    %19 = arith.maximumf %15, %18 : vector<128x64xf32>
    %20 = tpu.concatenate %17, %19 in 1 : vector<128x64xf32>, vector<128x64xf32> -> vector<128x128xf32>
    %21 = arith.truncf %20 : vector<128x128xf32> to vector<128x128xbf16>
    %c0_15 = arith.constant 0 : index
    %c0_16 = arith.constant 0 : index
    %22 = vector.load %arg5[%c0_15, %c0_16] : memref<128x64xbf16, #tpu.memory_space<vmem>>, vector<128x64xbf16>
    %cst_17 = arith.constant dense<0.000000e+00> : vector<128x64xf32>
    %23 = tpu.matmul %21, %22, %cst_17 {dimension_numbers = #tpu.dot_dimension_numbers<[1], [0], [0], [1], [0, 0, 1, 1], [], []>} : vector<128x128xbf16>, vector<128x64xbf16>, vector<128x64xf32> -> vector<128x64xf32>
    %c0_18 = arith.constant 0 : index
    %c0_19 = arith.constant 0 : index
    %24 = vector.load %arg6[%c0_18, %c0_19] : memref<1x64xf32, #tpu.memory_space<vmem>>, vector<1x64xf32>
    %25 = vector.broadcast %24 : vector<1x64xf32> to vector<128x64xf32>
    %26 = arith.addf %23, %25 : vector<128x64xf32>
    %cst_20 = arith.constant 0.000000e+00 : f32
    %27 = vector.broadcast %cst_20 : f32 to vector<128x64xf32>
    %28 = arith.maximumf %26, %27 : vector<128x64xf32>
    %29 = arith.truncf %28 : vector<128x64xf32> to vector<128x64xbf16>
    %c0_21 = arith.constant 0 : index
    %c0_22 = arith.constant 0 : index
    %30 = vector.load %arg9[%c0_21, %c0_22] : memref<128x64xbf16, #tpu.memory_space<vmem>>, vector<128x64xbf16>
    tpu.vector_store %arg9[%c0_21, %c0_22], %29 {strides = array<i32>} : memref<128x64xbf16, #tpu.memory_space<vmem>>, vector<128x64xbf16>,
    return
  }
  func.func @transform_0(%arg0: i32) -> (i32, i32) {
    %c0_i32 = arith.constant 0 : i32
    %c0_i32_0 = arith.constant 0 : i32
    %c0_i32_1 = arith.constant 0 : i32
    return %c0_i32, %c0_i32_0 : i32, i32
  }
  func.func @transform_1(%arg0: i32) -> (i32, i32) {
    %c0_i32 = arith.constant 0 : i32
    %c0_i32_0 = arith.constant 0 : i32
    %c0_i32_1 = arith.constant 0 : i32
    return %c0_i32, %c0_i32_0 : i32, i32
  }
  func.func @transform_2(%arg0: i32) -> (i32, i32) {
    %c0_i32 = arith.constant 0 : i32
    %c0_i32_0 = arith.constant 0 : i32
    %c0_i32_1 = arith.constant 0 : i32
    return %c0_i32, %c0_i32_0 : i32, i32
  }
  func.func @transform_3(%arg0: i32) -> (i32, i32) {
    %c0_i32 = arith.constant 0 : i32
    %c0_i32_0 = arith.constant 0 : i32
    %c0_i32_1 = arith.constant 0 : i32
    return %c0_i32, %c0_i32_0 : i32, i32
  }
  func.func @transform_4(%arg0: i32) -> (i32, i32) {
    %c0_i32 = arith.constant 0 : i32
    %c0_i32_0 = arith.constant 0 : i32
    %c0_i32_1 = arith.constant 0 : i32
    return %c0_i32, %c0_i32_0 : i32, i32
  }
  func.func @transform_5(%arg0: i32) -> (i32, i32) {
    %c0_i32 = arith.constant 0 : i32
    %c0_i32_0 = arith.constant 0 : i32
    %c0_i32_1 = arith.constant 0 : i32
    return %c0_i32, %c0_i32_0 : i32, i32
  }
  func.func @transform_6(%arg0: i32) -> (i32, i32) {
    %c0_i32 = arith.constant 0 : i32
    %c0_i32_0 = arith.constant 0 : i32
    return %arg0, %c0_i32 : i32, i32
  }
  func.func @transform_7(%arg0: i32) -> (i32, i32) {
    %c0_i32 = arith.constant 0 : i32
    %c0_i32_0 = arith.constant 0 : i32
    return %arg0, %c0_i32 : i32, i32
  }
  func.func @transform_8(%arg0: i32) -> (i32, i32) {
    %c0_i32 = arith.constant 0 : i32
    %c0_i32_0 = arith.constant 0 : i32
    return %arg0, %c0_i32 : i32, i32
  }
}

module attributes {stable_mosaic.version = 11 : i64} {
  func.func @fault_gnn_out_kernel(%arg0: i32, %arg1: memref<128x64xbf16, #tpu.memory_space<vmem>>, %arg2: memref<1x64xf32, #tpu.memory_space<vmem>>, %arg3: memref<1x1xf32, #tpu.memory_space<vmem>>, %arg4: memref<128x128xbf16, #tpu.memory_space<vmem>>, %arg5: memref<128x1xf32, #tpu.memory_space<vmem>>) attributes {dimension_semantics = [#tpu.dimension_semantics<parallel>], iteration_bounds = array<i64: 1>, scalar_prefetch = 0 : i64, scratch_operands = 0 : i64, tpu.core_type = #tpu.core_type<tc>, window_params = [{pipeline_mode = #tpu.pipeline_mode<synchronous>, transform_indices = @transform_0, window_bounds = array<i64: 128, 64>}, {pipeline_mode = #tpu.pipeline_mode<synchronous>, transform_indices = @transform_1, window_bounds = array<i64: 1, 64>}, {pipeline_mode = #tpu.pipeline_mode<synchronous>, transform_indices = @transform_2, window_bounds = array<i64: 1, 1>}, {transform_indices = @transform_3, window_bounds = array<i64: 128, 128>}, {transform_indices = @transform_4, window_bounds = array<i64: 128, 1>}]} {
    %c0 = arith.constant 0 : index
    %c0_0 = arith.constant 0 : index
    %0 = vector.load %arg4[%c0, %c0_0] : memref<128x128xbf16, #tpu.memory_space<vmem>>, vector<128x128xbf16>
    %c0_1 = arith.constant 0 : index
    %c0_2 = arith.constant 0 : index
    %1 = vector.load %arg1[%c0_1, %c0_2] : memref<128x64xbf16, #tpu.memory_space<vmem>>, vector<128x64xbf16>
    %cst = arith.constant dense<0.000000e+00> : vector<128x64xf32>
    %2 = tpu.matmul %0, %1, %cst {dimension_numbers = #tpu.dot_dimension_numbers<[1], [0], [0], [1], [0, 0, 1, 1], [], []>} : vector<128x128xbf16>, vector<128x64xbf16>, vector<128x64xf32> -> vector<128x64xf32>
    %c0_3 = arith.constant 0 : index
    %c0_4 = arith.constant 0 : index
    %3 = vector.load %arg2[%c0_3, %c0_4] : memref<1x64xf32, #tpu.memory_space<vmem>>, vector<1x64xf32>
    %4 = vector.broadcast %3 : vector<1x64xf32> to vector<128x64xf32>
    %5 = arith.mulf %2, %4 : vector<128x64xf32>
    %cst_5 = arith.constant dense<0.000000e+00> : vector<128xf32>
    %6 = vector.multi_reduction <add>, %5, %cst_5 [1] : vector<128x64xf32> to vector<128xf32>
    %7 = vector.shape_cast %6 : vector<128xf32> to vector<128x1xf32>
    %c0_6 = arith.constant 0 : index
    %c0_7 = arith.constant 0 : index
    %8 = vector.load %arg3[%c0_6, %c0_7] : memref<1x1xf32, #tpu.memory_space<vmem>>, vector<1x1xf32>
    %9 = vector.broadcast %8 : vector<1x1xf32> to vector<128x1xf32>
    %10 = arith.addf %7, %9 : vector<128x1xf32>
    %11 = arith.negf %10 : vector<128x1xf32>
    %12 = math.exp %11 : vector<128x1xf32>
    %cst_8 = arith.constant 1.000000e+00 : f32
    %13 = vector.broadcast %cst_8 : f32 to vector<128x1xf32>
    %14 = arith.addf %13, %12 : vector<128x1xf32>
    %15 = arith.divf %13, %14 : vector<128x1xf32>
    %c0_9 = arith.constant 0 : index
    %c0_10 = arith.constant 0 : index
    %16 = vector.load %arg5[%c0_9, %c0_10] : memref<128x1xf32, #tpu.memory_space<vmem>>, vector<128x1xf32>
    tpu.vector_store %arg5[%c0_9, %c0_10], %15 {strides = array<i32>} : memref<128x1xf32, #tpu.memory_space<vmem>>, vector<128x1xf32>,
    return
  }
  func.func @transform_0(%arg0: i32) -> (i32, i32) {
    %c0_i32 = arith.constant 0 : i32
    %c0_i32_0 = arith.constant 0 : i32
    %c0_i32_1 = arith.constant 0 : i32
    return %c0_i32, %c0_i32_0 : i32, i32
  }
  func.func @transform_1(%arg0: i32) -> (i32, i32) {
    %c0_i32 = arith.constant 0 : i32
    %c0_i32_0 = arith.constant 0 : i32
    %c0_i32_1 = arith.constant 0 : i32
    return %c0_i32, %c0_i32_0 : i32, i32
  }
  func.func @transform_2(%arg0: i32) -> (i32, i32) {
    %c0_i32 = arith.constant 0 : i32
    %c0_i32_0 = arith.constant 0 : i32
    %c0_i32_1 = arith.constant 0 : i32
    return %c0_i32, %c0_i32_0 : i32, i32
  }
  func.func @transform_3(%arg0: i32) -> (i32, i32) {
    %c0_i32 = arith.constant 0 : i32
    %c0_i32_0 = arith.constant 0 : i32
    return %arg0, %c0_i32 : i32, i32
  }
  func.func @transform_4(%arg0: i32) -> (i32, i32) {
    %c0_i32 = arith.constant 0 : i32
    %c0_i32_0 = arith.constant 0 : i32
    return %arg0, %c0_i32 : i32, i32
  }
}

</mosaic_0001>

<llo_original>
// kernel: fault_gnn_forward.3
$region0: #{fault_gnn_forward.3}
  #allocation0 [shape = 'u32[]', space=smem, size = 0x4, offset = 0x4, fixed_abs, tag = 'smem constant byte address 0x4 - core index']
  #allocation1 [shape = 'u32[144,128]{1,0:T(1,128)}', space=vmem, size = 0x12000, scoped, tag = 'internal scratch']
  #allocation2 [shape = 'f32[1,1]{1,0:T(1,128)S(1)}', space=vmem, size = 0x200, scoped, tag = 'scoped memory for fault_gnn_forward.3']
  %s0 = inlined_call_operand.vmem [shape: bf16[128,64], index: 0, kind: input, shape index: {}]
  %s1 = inlined_call_operand.vmem [shape: f32[1,64], index: 1, kind: input, shape index: {}]
  %s2 = inlined_call_operand.<no memory space> [shape: f32[1,1], index: 2, kind: input, shape index: {}]
  %s3 = inlined_call_operand.vmem [shape: bf16[128,128], index: 3, kind: input, shape index: {}]
  %s4 = inlined_call_operand.vmem [shape: f32[128,1], index: 4, kind: output, shape index: {}]
  %s5 = sld [smem:[#allocation0]]
  $region26: #{fault_gnn_forward.3} parent=0
    _
  %s7 = ssub.s32 1, %s5
  %s8 = scalar_select 0, %s7, %s5
  %v9 = vstv %s2
  %10 = vst [vmem:[#allocation2] sm:$0x1] %v9
  // Predicated region
  $region2: #{fault_gnn_forward.3} parent=0 // pred_check
    _
  $region3: #{fault_gnn_forward.3} parent=0 // pred_check_branch
    %12 = sbr.rel (0) target = $region5
  $region4: #{fault_gnn_forward.3} parent=0 // pred_region
    _
  $region5: #{fault_gnn_forward.3} parent=0 // pred_fallthru
    _
  // Predicated region
  $region6: #{fault_gnn_forward.3} parent=0 // pred_check
    _
  $region7: #{fault_gnn_forward.3} parent=0 // pred_check_branch
    %14 = sbr.rel (0) target = $region9
  $region8: #{fault_gnn_forward.3} parent=0 // pred_region
    _
  $region9: #{fault_gnn_forward.3} parent=0 // pred_fallthru
    _
  // Predicated region
  $region10: #{fault_gnn_forward.3} parent=0 // pred_check
    _
  $region11: #{fault_gnn_forward.3} parent=0 // pred_check_branch
    %16 = sbr.rel (0) target = $region13
  $region12: #{fault_gnn_forward.3} parent=0 // pred_region
    _
  $region13: #{fault_gnn_forward.3} parent=0 // pred_fallthru
    _
  // Predicated region
  $region14: #{fault_gnn_forward.3} parent=0 // pred_check
    _
  $region15: #{fault_gnn_forward.3} parent=0 // pred_check_branch
    %18 = sbr.rel (0) target = $region17
  $region16: #{fault_gnn_forward.3} parent=0 // pred_region
    _
  $region17: #{fault_gnn_forward.3} parent=0 // pred_fallthru
    _
  %v20 = vld [vmem:[%s3] sm:$0xf]
  %v21 = vld [vmem:[%s3 + $0x4] sm:$0xf]
  %v22 = vld [vmem:[%s3 + $0x8] sm:$0xf]
  %v23 = vld [vmem:[%s3 + $0xc] sm:$0xf]
  %v24 = vld [vmem:[%s3 + $0x10] sm:$0xf]
  %v25 = vld [vmem:[%s3 + $0x14] sm:$0xf]
  %v26 = vld [vmem:[%s3 + $0x18] sm:$0xf]
  %v27 = vld [vmem:[%s3 + $0x1c] sm:$0xf]
  %v28 = vld [vmem:[%s3 + $0x20] sm:$0xf]
  %v29 = vld [vmem:[%s3 + $0x24] sm:$0xf]
  %v30 = vld [vmem:[%s3 + $0x28] sm:$0xf]
  %v31 = vld [vmem:[%s3 + $0x2c] sm:$0xf]
  %v32 = vld [vmem:[%s3 + $0x30] sm:$0xf]
  %v33 = vld [vmem:[%s3 + $0x34] sm:$0xf]
  %v34 = vld [vmem:[%s3 + $0x38] sm:$0xf]
  %v35 = vld [vmem:[%s3 + $0x3c] sm:$0xf]
  %v36 = vld [vmem:[%s0] sm:$0xf]
  %v37 = vld [vmem:[%s0 + $0x4] sm:$0xf]
  %v38 = vld [vmem:[%s0 + $0x8] sm:$0xf]
  %v39 = vld [vmem:[%s0 + $0xc] sm:$0xf]
  %v40 = vld [vmem:[%s0 + $0x10] sm:$0xf]
  %v41 = vld [vmem:[%s0 + $0x14] sm:$0xf]
  %v42 = vld [vmem:[%s0 + $0x18] sm:$0xf]
  %v43 = vld [vmem:[%s0 + $0x1c] sm:$0xf]
  %v44 = vld [vmem:[%s0 + $0x20] sm:$0xf]
  %v45 = vld [vmem:[%s0 + $0x24] sm:$0xf]
  %v46 = vld [vmem:[%s0 + $0x28] sm:$0xf]
  %v47 = vld [vmem:[%s0 + $0x2c] sm:$0xf]
  %v48 = vld [vmem:[%s0 + $0x30] sm:$0xf]
  %v49 = vld [vmem:[%s0 + $0x34] sm:$0xf]
  %v50 = vld [vmem:[%s0 + $0x38] sm:$0xf]
  %v51 = vld [vmem:[%s0 + $0x3c] sm:$0xf]
  %v68 = vunpack.c.l.b16 %v20
  %v69 = vunpack.c.l.b16 %v21
  %v70 = vunpack.c.l.b16 %v22
  %v71 = vunpack.c.l.b16 %v23
  %v72 = vunpack.c.l.b16 %v24
  %v73 = vunpack.c.l.b16 %v25
  %v74 = vunpack.c.l.b16 %v26
  %v75 = vunpack.c.l.b16 %v27
  %v76 = vunpack.c.l.b16 %v28
  %v77 = vunpack.c.l.b16 %v29
  %v78 = vunpack.c.l.b16 %v30
  %v79 = vunpack.c.l.b16 %v31
  %v80 = vunpack.c.l.b16 %v32
  %v81 = vunpack.c.l.b16 %v33
  %v82 = vunpack.c.l.b16 %v34
  %v83 = vunpack.c.l.b16 %v35
  %v84 = vpack.c.b16 %v69, %v68
  %v85 = vpack.c.b16 %v71, %v70
  %v86 = vpack.c.b16 %v73, %v72
  %v87 = vpack.c.b16 %v75, %v74
  %v88 = vpack.c.b16 %v77, %v76
  %v89 = vpack.c.b16 %v79, %v78
  %v90 = vpack.c.b16 %v81, %v80
  %v91 = vpack.c.b16 %v83, %v82
  %v116 = vunpack.c.l.b16 %v36
  %v117 = vunpack.c.l.b16 %v37
  %v118 = vunpack.c.l.b16 %v38
  %v119 = vunpack.c.l.b16 %v39
  %v120 = vunpack.c.l.b16 %v40
  %v121 = vunpack.c.l.b16 %v41
  %v122 = vunpack.c.l.b16 %v42
  %v123 = vunpack.c.l.b16 %v43
  %v124 = vunpack.c.l.b16 %v44
  %v125 = vunpack.c.l.b16 %v45
  %v126 = vunpack.c.l.b16 %v46
  %v127 = vunpack.c.l.b16 %v47
  %v128 = vunpack.c.l.b16 %v48
  %v129 = vunpack.c.l.b16 %v49
  %v130 = vunpack.c.l.b16 %v50
  %v131 = vunpack.c.l.b16 %v51
  %v132 = vpack.c.b16 %v117, %v116
  %v133 = vpack.c.b16 %v119, %v118
  %v134 = vpack.c.b16 %v121, %v120
  %v135 = vpack.c.b16 %v123, %v122
  %v136 = vpack.c.b16 %v125, %v124
  %v137 = vpack.c.b16 %v127, %v126
  %v138 = vpack.c.b16 %v129, %v128
  %v139 = vpack.c.b16 %v131, %v130
  %148 = vmatprep.subr.bf16.mxu0 0
  %149 = vmatpush1.bf16.msra.mxu0 %v139
  %150 = vmatprep.subr.bf16.mxu0 0
  %151 = vmatpush1.bf16.msra.mxu0 %v138
  %152 = vmatprep.subr.bf16.mxu0 0
  %153 = vmatpush1.bf16.msra.mxu0 %v137
  %154 = vmatprep.subr.bf16.mxu0 0
  %155 = vmatpush1.bf16.msra.mxu0 %v136
  %156 = vmatprep.subr.bf16.mxu0 0
  %157 = vmatpush1.bf16.msra.mxu0 %v135
  %158 = vmatprep.subr.bf16.mxu0 0
  %159 = vmatpush1.bf16.msra.mxu0 %v134
  %160 = vmatprep.subr.bf16.mxu0 0
  %161 = vmatpush1.bf16.msra.mxu0 %v133
  %162 = vmatprep.subr.bf16.mxu0 0
  %163 = vmatpush1.bf16.msra.mxu0 %v132
  %164 = vmatprep.subr.bf16.mxu0 0
  %165 = vmatpush2.bf16.msra.mxu0 0
  %166 = vmatprep.subr.bf16.mxu0 0
  %167 = vmatpush2.bf16.msra.mxu0 0
  %168 = vmatprep.subr.bf16.mxu0 0
  %169 = vmatpush2.bf16.msra.mxu0 0
  %170 = vmatprep.subr.bf16.mxu0 0
  %171 = vmatpush2.bf16.msra.mxu0 0
  %172 = vmatprep.subr.bf16.mxu0 0
  %173 = vmatpush2.bf16.msra.mxu0 0
  %174 = vmatprep.subr.bf16.mxu0 0
  %175 = vmatpush2.bf16.msra.mxu0 0
  %176 = vmatprep.subr.bf16.mxu0 0
  %177 = vmatpush2.bf16.msra.mxu0 0
  %178 = vmatprep.subr.bf16.mxu0 0
  %179 = vmatpush2.bf16.msra.mxu0 0
  %180 = vmatprep.mubr.bf16.mxu0 0
  %181 = vmatmul.mubr.bf16.gmra.mxu0 %v84
  %v182 = vpop.f32.mrf.mxu0
  %v183 = vadd.f32 0.0, %v182
  %v184 = vpop.f32.mrf.mxu0
  %v185 = vpop.f32.mrf.mxu0
  %v186 = vadd.f32 0.0, %v185
  %v187 = vpop.f32.mrf.mxu0
  %188 = vmatprep.mubr.bf16.mxu0 0
  %189 = vmatmul.mubr.bf16.gmra.mxu0 %v85
  %v190 = vpop.f32.mrf.mxu0
  %v191 = vadd.f32 0.0, %v190
  %v192 = vpop.f32.mrf.mxu0
  %v193 = vpop.f32.mrf.mxu0
  %v194 = vadd.f32 0.0, %v193
  %v195 = vpop.f32.mrf.mxu0
  %196 = vmatprep.mubr.bf16.mxu0 0
  %197 = vmatmul.mubr.bf16.gmra.mxu0 %v86
  %v198 = vpop.f32.mrf.mxu0
  %v199 = vadd.f32 0.0, %v198
  %v200 = vpop.f32.mrf.mxu0
  %v201 = vpop.f32.mrf.mxu0
  %v202 = vadd.f32 0.0, %v201
  %v203 = vpop.f32.mrf.mxu0
  %204 = vmatprep.mubr.bf16.mxu0 0
  %205 = vmatmul.mubr.bf16.gmra.mxu0 %v87
  %v206 = vpop.f32.mrf.mxu0
  %v207 = vadd.f32 0.0, %v206
  %v208 = vpop.f32.mrf.mxu0
  %v209 = vpop.f32.mrf.mxu0
  %v210 = vadd.f32 0.0, %v209
  %v211 = vpop.f32.mrf.mxu0
  %212 = vmatprep.mubr.bf16.mxu0 0
  %213 = vmatmul.mubr.bf16.gmra.mxu0 %v88
  %v214 = vpop.f32.mrf.mxu0
  %v215 = vadd.f32 0.0, %v214
  %v216 = vpop.f32.mrf.mxu0
  %v217 = vpop.f32.mrf.mxu0
  %v218 = vadd.f32 0.0, %v217
  %v219 = vpop.f32.mrf.mxu0
  %220 = vmatprep.mubr.bf16.mxu0 0
  %221 = vmatmul.mubr.bf16.gmra.mxu0 %v89
  %v222 = vpop.f32.mrf.mxu0
  %v223 = vadd.f32 0.0, %v222
  %v224 = vpop.f32.mrf.mxu0
  %v225 = vpop.f32.mrf.mxu0
  %v226 = vadd.f32 0.0, %v225
  %v227 = vpop.f32.mrf.mxu0
  %228 = vmatprep.mubr.bf16.mxu0 0
  %229 = vmatmul.mubr.bf16.gmra.mxu0 %v90
  %v230 = vpop.f32.mrf.mxu0
  %v231 = vadd.f32 0.0, %v230
  %v232 = vpop.f32.mrf.mxu0
  %v233 = vpop.f32.mrf.mxu0
  %v234 = vadd.f32 0.0, %v233
  %v235 = vpop.f32.mrf.mxu0
  %236 = vmatprep.mubr.bf16.mxu0 0
  %237 = vmatmul.mubr.bf16.gmra.mxu0 %v91
  %v238 = vpop.f32.mrf.mxu0
  %v239 = vadd.f32 0.0, %v238
  %v240 = vpop.f32.mrf.mxu0
  %v241 = vpop.f32.mrf.mxu0
  %v242 = vadd.f32 0.0, %v241
  %v243 = vpop.f32.mrf.mxu0
  %244 = vdwg.mxu0
  %v245 = vld [vmem:[%s1] sm:$0x1]
  %v247 = vlaneseq
  %v248 = vshrl.u32 %v247, 7
  %v249 = vsub.s32 0, %v248
  %v250 = vrot.slane %v245, %v249
  %v252 = vmul.f32 %v183, %v250
  %v253 = vmul.f32 %v186, %v250
  %v254 = vmul.f32 %v191, %v250
  %v255 = vmul.f32 %v194, %v250
  %v256 = vmul.f32 %v199, %v250
  %v257 = vmul.f32 %v202, %v250
  %v258 = vmul.f32 %v207, %v250
  %v259 = vmul.f32 %v210, %v250
  %v260 = vmul.f32 %v215, %v250
  %v261 = vmul.f32 %v218, %v250
  %v262 = vmul.f32 %v223, %v250
  %v263 = vmul.f32 %v226, %v250
  %v264 = vmul.f32 %v231, %v250
  %v265 = vmul.f32 %v234, %v250
  %v266 = vmul.f32 %v239, %v250
  %v267 = vmul.f32 %v242, %v250
  %vm268 = vcmask 523264
  %v269 = vsel %vm268, %v252, 0.0
  %270 = vadd.xlane.f32.xlu0 %v269
  %v271 = vpop.xlane.xlu0 %270
  %v272 = vsel %vm268, %v253, 0.0
  %273 = vadd.xlane.f32.xlu0 %v272
  %v274 = vpop.xlane.xlu0 %273
  %v275 = vsel %vm268, %v254, 0.0
  %276 = vadd.xlane.f32.xlu0 %v275
  %v277 = vpop.xlane.xlu0 %276
  %v278 = vsel %vm268, %v255, 0.0
  %279 = vadd.xlane.f32.xlu0 %v278
  %v280 = vpop.xlane.xlu0 %279
  %v281 = vsel %vm268, %v256, 0.0
  %282 = vadd.xlane.f32.xlu0 %v281
  %v283 = vpop.xlane.xlu0 %282
  %v284 = vsel %vm268, %v257, 0.0
  %285 = vadd.xlane.f32.xlu0 %v284
  %v286 = vpop.xlane.xlu0 %285
  %v287 = vsel %vm268, %v258, 0.0
  %288 = vadd.xlane.f32.xlu0 %v287
  %v289 = vpop.xlane.xlu0 %288
  %v290 = vsel %vm268, %v259, 0.0
  %291 = vadd.xlane.f32.xlu0 %v290
  %v292 = vpop.xlane.xlu0 %291
  %v293 = vsel %vm268, %v260, 0.0
  %294 = vadd.xlane.f32.xlu0 %v293
  %v295 = vpop.xlane.xlu0 %294
  %v296 = vsel %vm268, %v261, 0.0
  %297 = vadd.xlane.f32.xlu0 %v296
  %v298 = vpop.xlane.xlu0 %297
  %v299 = vsel %vm268, %v262, 0.0
  %300 = vadd.xlane.f32.xlu0 %v299
  %v301 = vpop.xlane.xlu0 %300
  %v302 = vsel %vm268, %v263, 0.0
  %303 = vadd.xlane.f32.xlu0 %v302
  %v304 = vpop.xlane.xlu0 %303
  %v305 = vsel %vm268, %v264, 0.0
  %306 = vadd.xlane.f32.xlu0 %v305
  %v307 = vpop.xlane.xlu0 %306
  %v308 = vsel %vm268, %v265, 0.0
  %309 = vadd.xlane.f32.xlu0 %v308
  %v310 = vpop.xlane.xlu0 %309
  %v311 = vsel %vm268, %v266, 0.0
  %312 = vadd.xlane.f32.xlu0 %v311
  %v313 = vpop.xlane.xlu0 %312
  %v314 = vsel %vm268, %v267, 0.0
  %315 = vadd.xlane.f32.xlu0 %v314
  %v316 = vpop.xlane.xlu0 %315
  %v317 = vld [vmem:[#allocation2] sm:$0x1]
  %v319 = vlaneseq
  %v320 = vshrl.u32 %v319, 7
  %v321 = vsub.s32 0, %v320
  %v322 = vrot.slane %v317, %v321
  %v324 = vadd.f32 %v271, %v322
  %v325 = vadd.f32 %v274, %v322
  %v326 = vadd.f32 %v277, %v322
  %v327 = vadd.f32 %v280, %v322
  %v328 = vadd.f32 %v283, %v322
  %v329 = vadd.f32 %v286, %v322
  %v330 = vadd.f32 %v289, %v322
  %v331 = vadd.f32 %v292, %v322
  %v332 = vadd.f32 %v295, %v322
  %v333 = vadd.f32 %v298, %v322
  %v334 = vadd.f32 %v301, %v322
  %v335 = vadd.f32 %v304, %v322
  %v336 = vadd.f32 %v307, %v322
  %v337 = vadd.f32 %v310, %v322
  %v338 = vadd.f32 %v313, %v322
  %v339 = vadd.f32 %v316, %v322
  %v340 = vxor.u32 %v324, 2147483648
  %v341 = vxor.u32 %v325, 2147483648
  %v342 = vxor.u32 %v326, 2147483648
  %v343 = vxor.u32 %v327, 2147483648
  %v344 = vxor.u32 %v328, 2147483648
  %v345 = vxor.u32 %v329, 2147483648
  %v346 = vxor.u32 %v330, 2147483648
  %v347 = vxor.u32 %v331, 2147483648
  %v348 = vxor.u32 %v332, 2147483648
  %v349 = vxor.u32 %v333, 2147483648
  %v350 = vxor.u32 %v334, 2147483648
  %v351 = vxor.u32 %v335, 2147483648
  %v352 = vxor.u32 %v336, 2147483648
  %v353 = vxor.u32 %v337, 2147483648
  %v354 = vxor.u32 %v338, 2147483648
  %v355 = vxor.u32 %v339, 2147483648
  %v356 = vmul.f32 %v340, 1.442695
  %v357 = vpow.pop %v356
  %v358 = vmul.f32 %v341, 1.442695
  %v359 = vpow.pop %v358
  %v360 = vmul.f32 %v342, 1.442695
  %v361 = vpow.pop %v360
  %v362 = vmul.f32 %v343, 1.442695
  %v363 = vpow.pop %v362
  %v364 = vmul.f32 %v344, 1.442695
  %v365 = vpow.pop %v364
  %v366 = vmul.f32 %v345, 1.442695
  %v367 = vpow.pop %v366
  %v368 = vmul.f32 %v346, 1.442695
  %v369 = vpow.pop %v368
  %v370 = vmul.f32 %v347, 1.442695
  %v371 = vpow.pop %v370
  %v372 = vmul.f32 %v348, 1.442695
  %v373 = vpow.pop %v372
  %v374 = vmul.f32 %v349, 1.442695
  %v375 = vpow.pop %v374
  %v376 = vmul.f32 %v350, 1.442695
  %v377 = vpow.pop %v376
  %v378 = vmul.f32 %v351, 1.442695
  %v379 = vpow.pop %v378
  %v380 = vmul.f32 %v352, 1.442695
  %v381 = vpow.pop %v380
  %v382 = vmul.f32 %v353, 1.442695
  %v383 = vpow.pop %v382
  %v384 = vmul.f32 %v354, 1.442695
  %v385 = vpow.pop %v384
  %v386 = vmul.f32 %v355, 1.442695
  %v387 = vpow.pop %v386
  %v388 = vadd.f32 %v357, 1.0
  %v389 = vadd.f32 %v359, 1.0
  %v390 = vadd.f32 %v361, 1.0
  %v391 = vadd.f32 %v363, 1.0
  %v392 = vadd.f32 %v365, 1.0
  %v393 = vadd.f32 %v367, 1.0
  %v394 = vadd.f32 %v369, 1.0
  %v395 = vadd.f32 %v371, 1.0
  %v396 = vadd.f32 %v373, 1.0
  %v397 = vadd.f32 %v375, 1.0
  %v398 = vadd.f32 %v377, 1.0
  %v399 = vadd.f32 %v379, 1.0
  %v400 = vadd.f32 %v381, 1.0
  %v401 = vadd.f32 %v383, 1.0
  %v402 = vadd.f32 %v385, 1.0
  %v403 = vadd.f32 %v387, 1.0
  %v404 = vrcp.pop %v388
  %v405 = vmul.f32 1.0, %v404
  %v406 = vrcp.pop %v389
  %v407 = vmul.f32 1.0, %v406
  %v408 = vrcp.pop %v390
  %v409 = vmul.f32 1.0, %v408
  %v410 = vrcp.pop %v391
  %v411 = vmul.f32 1.0, %v410
  %v412 = vrcp.pop %v392
  %v413 = vmul.f32 1.0, %v412
  %v414 = vrcp.pop %v393
  %v415 = vmul.f32 1.0, %v414
  %v416 = vrcp.pop %v394
  %v417 = vmul.f32 1.0, %v416
  %v418 = vrcp.pop %v395
  %v419 = vmul.f32 1.0, %v418
  %v420 = vrcp.pop %v396
  %v421 = vmul.f32 1.0, %v420
  %v422 = vrcp.pop %v397
  %v423 = vmul.f32 1.0, %v422
  %v424 = vrcp.pop %v398
  %v425 = vmul.f32 1.0, %v424
  %v426 = vrcp.pop %v399
  %v427 = vmul.f32 1.0, %v426
  %v428 = vrcp.pop %v400
  %v429 = vmul.f32 1.0, %v428
  %v430 = vrcp.pop %v401
  %v431 = vmul.f32 1.0, %v430
  %v432 = vrcp.pop %v402
  %v433 = vmul.f32 1.0, %v432
  %v434 = vrcp.pop %v403
  %v435 = vmul.f32 1.0, %v434
  %vm436 = vcmask 7168
  %437 = vst.msk [vmem:[%s4] sm:$0xff] %vm436, %v405
  %438 = vst.msk [vmem:[%s4 + $0x8] sm:$0xff] %vm436, %v407
  %439 = vst.msk [vmem:[%s4 + $0x10] sm:$0xff] %vm436, %v409
  %440 = vst.msk [vmem:[%s4 + $0x18] sm:$0xff] %vm436, %v411
  %441 = vst.msk [vmem:[%s4 + $0x20] sm:$0xff] %vm436, %v413
  %442 = vst.msk [vmem:[%s4 + $0x28] sm:$0xff] %vm436, %v415
  %443 = vst.msk [vmem:[%s4 + $0x30] sm:$0xff] %vm436, %v417
  %444 = vst.msk [vmem:[%s4 + $0x38] sm:$0xff] %vm436, %v419
  %445 = vst.msk [vmem:[%s4 + $0x40] sm:$0xff] %vm436, %v421
  %446 = vst.msk [vmem:[%s4 + $0x48] sm:$0xff] %vm436, %v423
  %447 = vst.msk [vmem:[%s4 + $0x50] sm:$0xff] %vm436, %v425
  %448 = vst.msk [vmem:[%s4 + $0x58] sm:$0xff] %vm436, %v427
  %449 = vst.msk [vmem:[%s4 + $0x60] sm:$0xff] %vm436, %v429
  %450 = vst.msk [vmem:[%s4 + $0x68] sm:$0xff] %vm436, %v431
  %451 = vst.msk [vmem:[%s4 + $0x70] sm:$0xff] %vm436, %v433
  %452 = vst.msk [vmem:[%s4 + $0x78] sm:$0xff] %vm436, %v435
  // Predicated region
  $region18: #{fault_gnn_forward.3} parent=0 // pred_check
    _
  $region19: #{fault_gnn_forward.3} parent=0 // pred_check_branch
    %454 = sbr.rel (0) target = $region21
  $region20: #{fault_gnn_forward.3} parent=0 // pred_region
    _
  $region21: #{fault_gnn_forward.3} parent=0 // pred_fallthru
    _
  // Predicated region
  $region22: #{fault_gnn_forward.3} parent=0 // pred_check
    _
  $region23: #{fault_gnn_forward.3} parent=0 // pred_check_branch
    %456 = sbr.rel (0) target = $region25
  $region24: #{fault_gnn_forward.3} parent=0 // pred_region
    _
  $region25: #{fault_gnn_forward.3} parent=0 // pred_fallthru
    _

// kernel: fault_gnn_forward.2
$region0: #{fault_gnn_forward.2}
  #allocation0 [shape = 'u32[]', space=smem, size = 0x4, offset = 0x4, fixed_abs, tag = 'smem constant byte address 0x4 - core index']
  #allocation1 [shape = 'u32[144,128]{1,0:T(1,128)}', space=vmem, size = 0x12000, scoped, tag = 'internal scratch']
  %s0 = inlined_call_operand.vmem [shape: bf16[128,4], index: 0, kind: input, shape index: {}]
  %s1 = inlined_call_operand.vmem [shape: bf16[4,128], index: 1, kind: input, shape index: {}]
  %s2 = inlined_call_operand.vmem [shape: f32[1,64], index: 2, kind: input, shape index: {}]
  %s3 = inlined_call_operand.vmem [shape: f32[1,64], index: 3, kind: input, shape index: {}]
  %s4 = inlined_call_operand.vmem [shape: bf16[128,64], index: 4, kind: input, shape index: {}]
  %s5 = inlined_call_operand.vmem [shape: f32[1,64], index: 5, kind: input, shape index: {}]
  %s6 = inlined_call_operand.vmem [shape: bf16[128,128], index: 6, kind: input, shape index: {}]
  %s7 = inlined_call_operand.vmem [shape: bf16[128,128], index: 7, kind: input, shape index: {}]
  %s8 = inlined_call_operand.vmem [shape: bf16[128,64], index: 8, kind: output, shape index: {}]
  %s9 = sld [smem:[#allocation0]]
  $region42: #{fault_gnn_forward.2} parent=0
    _
  %s11 = ssub.s32 1, %s9
  %s12 = scalar_select 0, %s11, %s9
  // Predicated region
  $region2: #{fault_gnn_forward.2} parent=0 // pred_check
    _
  $region3: #{fault_gnn_forward.2} parent=0 // pred_check_branch
    %14 = sbr.rel (0) target = $region5
  $region4: #{fault_gnn_forward.2} parent=0 // pred_region
    _
  $region5: #{fault_gnn_forward.2} parent=0 // pred_fallthru
    _
  // Predicated region
  $region6: #{fault_gnn_forward.2} parent=0 // pred_check
    _
  $region7: #{fault_gnn_forward.2} parent=0 // pred_check_branch
    %16 = sbr.rel (0) target = $region9
  $region8: #{fault_gnn_forward.2} parent=0 // pred_region
    _
  $region9: #{fault_gnn_forward.2} parent=0 // pred_fallthru
    _
  // Predicated region
  $region10: #{fault_gnn_forward.2} parent=0 // pred_check
    _
  $region11: #{fault_gnn_forward.2} parent=0 // pred_check_branch
    %18 = sbr.rel (0) target = $region13
  $region12: #{fault_gnn_forward.2} parent=0 // pred_region
    _
  $region13: #{fault_gnn_forward.2} parent=0 // pred_fallthru
    _
  // Predicated region
  $region14: #{fault_gnn_forward.2} parent=0 // pred_check
    _
  $region15: #{fault_gnn_forward.2} parent=0 // pred_check_branch
    %20 = sbr.rel (0) target = $region17
  $region16: #{fault_gnn_forward.2} parent=0 // pred_region
    _
  $region17: #{fault_gnn_forward.2} parent=0 // pred_fallthru
    _
  // Predicated region
  $region18: #{fault_gnn_forward.2} parent=0 // pred_check
    _
  $region19: #{fault_gnn_forward.2} parent=0 // pred_check_branch
    %22 = sbr.rel (0) target = $region21
  $region20: #{fault_gnn_forward.2} parent=0 // pred_region
    _
  $region21: #{fault_gnn_forward.2} parent=0 // pred_fallthru
    _
  // Predicated region
  $region22: #{fault_gnn_forward.2} parent=0 // pred_check
    _
  $region23: #{fault_gnn_forward.2} parent=0 // pred_check_branch
    %24 = sbr.rel (0) target = $region25
  $region24: #{fault_gnn_forward.2} parent=0 // pred_region
    _
  $region25: #{fault_gnn_forward.2} parent=0 // pred_fallthru
    _
  // Predicated region
  $region26: #{fault_gnn_forward.2} parent=0 // pred_check
    _
  $region27: #{fault_gnn_forward.2} parent=0 // pred_check_branch
    %26 = sbr.rel (0) target = $region29
  $region28: #{fault_gnn_forward.2} parent=0 // pred_region
    _
  $region29: #{fault_gnn_forward.2} parent=0 // pred_fallthru
    _
  // Predicated region
  $region30: #{fault_gnn_forward.2} parent=0 // pred_check
    _
  $region31: #{fault_gnn_forward.2} parent=0 // pred_check_branch
    %28 = sbr.rel (0) target = $region33
  $region32: #{fault_gnn_forward.2} parent=0 // pred_region
    _
  $region33: #{fault_gnn_forward.2} parent=0 // pred_fallthru
    _
  %v30 = vld [vmem:[%s0] sm:$0xf]
  %v31 = vld [vmem:[%s0 + $0x4] sm:$0xf]
  %v32 = vld [vmem:[%s0 + $0x8] sm:$0xf]
  %v33 = vld [vmem:[%s0 + $0xc] sm:$0xf]
  %v34 = vld [vmem:[%s0 + $0x10] sm:$0xf]
  %v35 = vld [vmem:[%s0 + $0x14] sm:$0xf]
  %v36 = vld [vmem:[%s0 + $0x18] sm:$0xf]
  %v37 = vld [vmem:[%s0 + $0x1c] sm:$0xf]
  %v38 = vld [vmem:[%s0 + $0x20] sm:$0xf]
  %v39 = vld [vmem:[%s0 + $0x24] sm:$0xf]
  %v40 = vld [vmem:[%s0 + $0x28] sm:$0xf]
  %v41 = vld [vmem:[%s0 + $0x2c] sm:$0xf]
  %v42 = vld [vmem:[%s0 + $0x30] sm:$0xf]
  %v43 = vld [vmem:[%s0 + $0x34] sm:$0xf]
  %v44 = vld [vmem:[%s0 + $0x38] sm:$0xf]
  %v45 = vld [vmem:[%s0 + $0x3c] sm:$0xf]
  %v46 = vld [vmem:[%s1] sm:$0x3]
  %v63 = vunpack.c.l.b16 %v30
  %v64 = vunpack.c.l.b16 %v31
  %v65 = vunpack.c.l.b16 %v32
  %v66 = vunpack.c.l.b16 %v33
  %v67 = vunpack.c.l.b16 %v34
  %v68 = vunpack.c.l.b16 %v35
  %v69 = vunpack.c.l.b16 %v36
  %v70 = vunpack.c.l.b16 %v37
  %v71 = vunpack.c.l.b16 %v38
  %v72 = vunpack.c.l.b16 %v39
  %v73 = vunpack.c.l.b16 %v40
  %v74 = vunpack.c.l.b16 %v41
  %v75 = vunpack.c.l.b16 %v42
  %v76 = vunpack.c.l.b16 %v43
  %v77 = vunpack.c.l.b16 %v44
  %v78 = vunpack.c.l.b16 %v45
  %v79 = vpack.c.b16 %v64, %v63
  %v80 = vpack.c.b16 %v66, %v65
  %v81 = vpack.c.b16 %v68, %v67
  %v82 = vpack.c.b16 %v70, %v69
  %v83 = vpack.c.b16 %v72, %v71
  %v84 = vpack.c.b16 %v74, %v73
  %v85 = vpack.c.b16 %v76, %v75
  %v86 = vpack.c.b16 %v78, %v77
  %vm87 = vcmask 31744
  %v89 = vsel %vm87, %v79, 0
  %v92 = vsel %vm87, %v80, 0
  %v95 = vsel %vm87, %v81, 0
  %v98 = vsel %vm87, %v82, 0
  %v101 = vsel %vm87, %v83, 0
  %v104 = vsel %vm87, %v84, 0
  %v107 = vsel %vm87, %v85, 0
  %v110 = vsel %vm87, %v86, 0
  %vm112 = vcmask 1041408
  %v114 = vsel %vm112, %v46, 0
  %116 = vmatprep.subr.bf16.mxu0 0
  %117 = vmatpush1.bf16.msra.mxu0 0
  %118 = vmatprep.subr.bf16.mxu0 0
  %119 = vmatpush1.bf16.msra.mxu0 0
  %120 = vmatprep.subr.bf16.mxu0 0
  %121 = vmatpush1.bf16.msra.mxu0 0
  %122 = vmatprep.subr.bf16.mxu0 0
  %123 = vmatpush1.bf16.msra.mxu0 0
  %124 = vmatprep.subr.bf16.mxu0 0
  %125 = vmatpush1.bf16.msra.mxu0 0
  %126 = vmatprep.subr.bf16.mxu0 0
  %127 = vmatpush1.bf16.msra.mxu0 0
  %128 = vmatprep.subr.bf16.mxu0 0
  %129 = vmatpush1.bf16.msra.mxu0 0
  %130 = vmatprep.subr.bf16.mxu0 0
  %131 = vmatpush1.bf16.msra.mxu0 %v114
  %132 = vmatprep.subr.bf16.mxu0 0
  %133 = vmatpush2.bf16.msra.mxu0 0
  %134 = vmatprep.subr.bf16.mxu0 0
  %135 = vmatpush2.bf16.msra.mxu0 0
  %136 = vmatprep.subr.bf16.mxu0 0
  %137 = vmatpush2.bf16.msra.mxu0 0
  %138 = vmatprep.subr.bf16.mxu0 0
  %139 = vmatpush2.bf16.msra.mxu0 0
  %140 = vmatprep.subr.bf16.mxu0 0
  %141 = vmatpush2.bf16.msra.mxu0 0
  %142 = vmatprep.subr.bf16.mxu0 0
  %143 = vmatpush2.bf16.msra.mxu0 0
  %144 = vmatprep.subr.bf16.mxu0 0
  %145 = vmatpush2.bf16.msra.mxu0 0
  %146 = vmatprep.subr.bf16.mxu0 0
  %147 = vmatpush2.bf16.msra.mxu0 0
  %148 = vmatprep.mubr.bf16.mxu0 0
  %149 = vmatmul.mubr.bf16.gmra.mxu0 %v89
  %v150 = vpop.f32.mrf.mxu0
  %v151 = vadd.f32 0.0, %v150
  %v152 = vpop.f32.mrf.mxu0
  %v153 = vpop.f32.mrf.mxu0
  %v154 = vadd.f32 0.0, %v153
  %v155 = vpop.f32.mrf.mxu0
  %156 = vmatprep.mubr.bf16.mxu0 0
  %157 = vmatmul.mubr.bf16.gmra.mxu0 %v92
  %v158 = vpop.f32.mrf.mxu0
  %v159 = vadd.f32 0.0, %v158
  %v160 = vpop.f32.mrf.mxu0
  %v161 = vpop.f32.mrf.mxu0
  %v162 = vadd.f32 0.0, %v161
  %v163 = vpop.f32.mrf.mxu0
  %164 = vmatprep.mubr.bf16.mxu0 0
  %165 = vmatmul.mubr.bf16.gmra.mxu0 %v95
  %v166 = vpop.f32.mrf.mxu0
  %v167 = vadd.f32 0.0, %v166
  %v168 = vpop.f32.mrf.mxu0
  %v169 = vpop.f32.mrf.mxu0
  %v170 = vadd.f32 0.0, %v169
  %v171 = vpop.f32.mrf.mxu0
  %172 = vmatprep.mubr.bf16.mxu0 0
  %173 = vmatmul.mubr.bf16.gmra.mxu0 %v98
  %v174 = vpop.f32.mrf.mxu0
  %v175 = vadd.f32 0.0, %v174
  %v176 = vpop.f32.mrf.mxu0
  %v177 = vpop.f32.mrf.mxu0
  %v178 = vadd.f32 0.0, %v177
  %v179 = vpop.f32.mrf.mxu0
  %180 = vmatprep.mubr.bf16.mxu0 0
  %181 = vmatmul.mubr.bf16.gmra.mxu0 %v101
  %v182 = vpop.f32.mrf.mxu0
  %v183 = vadd.f32 0.0, %v182
  %v184 = vpop.f32.mrf.mxu0
  %v185 = vpop.f32.mrf.mxu0
  %v186 = vadd.f32 0.0, %v185
  %v187 = vpop.f32.mrf.mxu0
  %188 = vmatprep.mubr.bf16.mxu0 0
  %189 = vmatmul.mubr.bf16.gmra.mxu0 %v104
  %v190 = vpop.f32.mrf.mxu0
  %v191 = vadd.f32 0.0, %v190
  %v192 = vpop.f32.mrf.mxu0
  %v193 = vpop.f32.mrf.mxu0
  %v194 = vadd.f32 0.0, %v193
  %v195 = vpop.f32.mrf.mxu0
  %196 = vmatprep.mubr.bf16.mxu0 0
  %197 = vmatmul.mubr.bf16.gmra.mxu0 %v107
  %v198 = vpop.f32.mrf.mxu0
  %v199 = vadd.f32 0.0, %v198
  %v200 = vpop.f32.mrf.mxu0
  %v201 = vpop.f32.mrf.mxu0
  %v202 = vadd.f32 0.0, %v201
  %v203 = vpop.f32.mrf.mxu0
  %204 = vmatprep.mubr.bf16.mxu0 0
  %205 = vmatmul.mubr.bf16.gmra.mxu0 %v110
  %v206 = vpop.f32.mrf.mxu0
  %v207 = vadd.f32 0.0, %v206
  %v208 = vpop.f32.mrf.mxu0
  %v209 = vpop.f32.mrf.mxu0
  %v210 = vadd.f32 0.0, %v209
  %v211 = vpop.f32.mrf.mxu0
  %212 = vdwg.mxu0
  %v213 = vpack.c.bf16 %v154, %v151
  %v214 = vpack.c.bf16 %v162, %v159
  %v215 = vpack.c.bf16 %v170, %v167
  %v216 = vpack.c.bf16 %v178, %v175
  %v217 = vpack.c.bf16 %v186, %v183
  %v218 = vpack.c.bf16 %v194, %v191
  %v219 = vpack.c.bf16 %v202, %v199
  %v220 = vpack.c.bf16 %v210, %v207
  %v221 = vld [vmem:[%s6] sm:$0xf]
  %v222 = vld [vmem:[%s6 + $0x4] sm:$0xf]
  %v223 = vld [vmem:[%s6 + $0x8] sm:$0xf]
  %v224 = vld [vmem:[%s6 + $0xc] sm:$0xf]
  %v225 = vld [vmem:[%s6 + $0x10] sm:$0xf]
  %v226 = vld [vmem:[%s6 + $0x14] sm:$0xf]
  %v227 = vld [vmem:[%s6 + $0x18] sm:$0xf]
  %v228 = vld [vmem:[%s6 + $0x1c] sm:$0xf]
  %v229 = vld [vmem:[%s6 + $0x20] sm:$0xf]
  %v230 = vld [vmem:[%s6 + $0x24] sm:$0xf]
  %v231 = vld [vmem:[%s6 + $0x28] sm:$0xf]
  %v232 = vld [vmem:[%s6 + $0x2c] sm:$0xf]
  %v233 = vld [vmem:[%s6 + $0x30] sm:$0xf]
  %v234 = vld [vmem:[%s6 + $0x34] sm:$0xf]
  %v235 = vld [vmem:[%s6 + $0x38] sm:$0xf]
  %v236 = vld [vmem:[%s6 + $0x3c] sm:$0xf]
  %v237 = vld [vmem:[%s2] sm:$0x1]
  %v239 = vlaneseq
  %v240 = vshrl.u32 %v239, 7
  %v241 = vsub.s32 0, %v240
  %v242 = vrot.slane %v237, %v241
  %v260 = vunpack.c.l.b16 %v221
  %v261 = vunpack.c.l.b16 %v222
  %v262 = vunpack.c.l.b16 %v223
  %v263 = vunpack.c.l.b16 %v224
  %v264 = vunpack.c.l.b16 %v225
  %v265 = vunpack.c.l.b16 %v226
  %v266 = vunpack.c.l.b16 %v227
  %v267 = vunpack.c.l.b16 %v228
  %v268 = vunpack.c.l.b16 %v229
  %v269 = vunpack.c.l.b16 %v230
  %v270 = vunpack.c.l.b16 %v231
  %v271 = vunpack.c.l.b16 %v232
  %v272 = vunpack.c.l.b16 %v233
  %v273 = vunpack.c.l.b16 %v234
  %v274 = vunpack.c.l.b16 %v235
  %v275 = vunpack.c.l.b16 %v236
  %v276 = vpack.c.b16 %v261, %v260
  %v277 = vpack.c.b16 %v263, %v262
  %v278 = vpack.c.b16 %v265, %v264
  %v279 = vpack.c.b16 %v267, %v266
  %v280 = vpack.c.b16 %v269, %v268
  %v281 = vpack.c.b16 %v271, %v270
  %v282 = vpack.c.b16 %v273, %v272
  %v283 = vpack.c.b16 %v275, %v274
  %292 = vmatprep.subr.bf16.mxu0 0
  %293 = vmatpush1.bf16.msra.mxu0 %v220
  %294 = vmatprep.subr.bf16.mxu0 0
  %295 = vmatpush1.bf16.msra.mxu0 %v219
  %296 = vmatprep.subr.bf16.mxu0 0
  %297 = vmatpush1.bf16.msra.mxu0 %v218
  %298 = vmatprep.subr.bf16.mxu0 0
  %299 = vmatpush1.bf16.msra.mxu0 %v217
  %300 = vmatprep.subr.bf16.mxu0 0
  %301 = vmatpush1.bf16.msra.mxu0 %v216
  %302 = vmatprep.subr.bf16.mxu0 0
  %303 = vmatpush1.bf16.msra.mxu0 %v215
  %304 = vmatprep.subr.bf16.mxu0 0
  %305 = vmatpush1.bf16.msra.mxu0 %v214
  %306 = vmatprep.subr.bf16.mxu0 0
  %307 = vmatpush1.bf16.msra.mxu0 %v213
  %308 = vmatprep.subr.bf16.mxu0 0
  %309 = vmatpush2.bf16.msra.mxu0 0
  %310 = vmatprep.subr.bf16.mxu0 0
  %311 = vmatpush2.bf16.msra.mxu0 0
  %312 = vmatprep.subr.bf16.mxu0 0
  %313 = vmatpush2.bf16.msra.mxu0 0
  %314 = vmatprep.subr.bf16.mxu0 0
  %315 = vmatpush2.bf16.msra.mxu0 0
  %316 = vmatprep.subr.bf16.mxu0 0
  %317 = vmatpush2.bf16.msra.mxu0 0
  %318 = vmatprep.subr.bf16.mxu0 0
  %319 = vmatpush2.bf16.msra.mxu0 0
  %320 = vmatprep.subr.bf16.mxu0 0
  %321 = vmatpush2.bf16.msra.mxu0 0
  %322 = vmatprep.subr.bf16.mxu0 0
  %323 = vmatpush2.bf16.msra.mxu0 0
  %324 = vmatprep.mubr.bf16.mxu0 0
  %325 = vmatmul.mubr.bf16.gmra.mxu0 %v276
  %v326 = vpop.f32.mrf.mxu0
  %v327 = vadd.f32 %v242, %v326
  %v328 = vpop.f32.mrf.mxu0
  %v329 = vpop.f32.mrf.mxu0
  %v330 = vadd.f32 %v242, %v329
  %v331 = vpop.f32.mrf.mxu0
  %332 = vmatprep.mubr.bf16.mxu0 0
  %333 = vmatmul.mubr.bf16.gmra.mxu0 %v277
  %v334 = vpop.f32.mrf.mxu0
  %v335 = vadd.f32 %v242, %v334
  %v336 = vpop.f32.mrf.mxu0
  %v337 = vpop.f32.mrf.mxu0
  %v338 = vadd.f32 %v242, %v337
  %v339 = vpop.f32.mrf.mxu0
  %340 = vmatprep.mubr.bf16.mxu0 0
  %341 = vmatmul.mubr.bf16.gmra.mxu0 %v278
  %v342 = vpop.f32.mrf.mxu0
  %v343 = vadd.f32 %v242, %v342
  %v344 = vpop.f32.mrf.mxu0
  %v345 = vpop.f32.mrf.mxu0
  %v346 = vadd.f32 %v242, %v345
  %v347 = vpop.f32.mrf.mxu0
  %348 = vmatprep.mubr.bf16.mxu0 0
  %349 = vmatmul.mubr.bf16.gmra.mxu0 %v279
  %v350 = vpop.f32.mrf.mxu0
  %v351 = vadd.f32 %v242, %v350
  %v352 = vpop.f32.mrf.mxu0
  %v353 = vpop.f32.mrf.mxu0
  %v354 = vadd.f32 %v242, %v353
  %v355 = vpop.f32.mrf.mxu0
  %356 = vmatprep.mubr.bf16.mxu0 0
  %357 = vmatmul.mubr.bf16.gmra.mxu0 %v280
  %v358 = vpop.f32.mrf.mxu0
  %v359 = vadd.f32 %v242, %v358
  %v360 = vpop.f32.mrf.mxu0
  %v361 = vpop.f32.mrf.mxu0
  %v362 = vadd.f32 %v242, %v361
  %v363 = vpop.f32.mrf.mxu0
  %364 = vmatprep.mubr.bf16.mxu0 0
  %365 = vmatmul.mubr.bf16.gmra.mxu0 %v281
  %v366 = vpop.f32.mrf.mxu0
  %v367 = vadd.f32 %v242, %v366
  %v368 = vpop.f32.mrf.mxu0
  %v369 = vpop.f32.mrf.mxu0
  %v370 = vadd.f32 %v242, %v369
  %v371 = vpop.f32.mrf.mxu0
  %372 = vmatprep.mubr.bf16.mxu0 0
  %373 = vmatmul.mubr.bf16.gmra.mxu0 %v282
  %v374 = vpop.f32.mrf.mxu0
  %v375 = vadd.f32 %v242, %v374
  %v376 = vpop.f32.mrf.mxu0
  %v377 = vpop.f32.mrf.mxu0
  %v378 = vadd.f32 %v242, %v377
  %v379 = vpop.f32.mrf.mxu0
  %380 = vmatprep.mubr.bf16.mxu0 0
  %381 = vmatmul.mubr.bf16.gmra.mxu0 %v283
  %v382 = vpop.f32.mrf.mxu0
  %v383 = vadd.f32 %v242, %v382
  %v384 = vpop.f32.mrf.mxu0
  %v385 = vpop.f32.mrf.mxu0
  %v386 = vadd.f32 %v242, %v385
  %v387 = vpop.f32.mrf.mxu0
  %388 = vdwg.mxu0
  %v389 = vld [vmem:[%s7] sm:$0xf]
  %v390 = vld [vmem:[%s7 + $0x4] sm:$0xf]
  %v391 = vld [vmem:[%s7 + $0x8] sm:$0xf]
  %v392 = vld [vmem:[%s7 + $0xc] sm:$0xf]
  %v393 = vld [vmem:[%s7 + $0x10] sm:$0xf]
  %v394 = vld [vmem:[%s7 + $0x14] sm:$0xf]
  %v395 = vld [vmem:[%s7 + $0x18] sm:$0xf]
  %v396 = vld [vmem:[%s7 + $0x1c] sm:$0xf]
  %v397 = vld [vmem:[%s7 + $0x20] sm:$0xf]
  %v398 = vld [vmem:[%s7 + $0x24] sm:$0xf]
  %v399 = vld [vmem:[%s7 + $0x28] sm:$0xf]
  %v400 = vld [vmem:[%s7 + $0x2c] sm:$0xf]
  %v401 = vld [vmem:[%s7 + $0x30] sm:$0xf]
  %v402 = vld [vmem:[%s7 + $0x34] sm:$0xf]
  %v403 = vld [vmem:[%s7 + $0x38] sm:$0xf]
  %v404 = vld [vmem:[%s7 + $0x3c] sm:$0xf]
  %v405 = vld [vmem:[%s3] sm:$0x1]
  %v407 = vlaneseq
  %v408 = vshrl.u32 %v407, 7
  %v409 = vsub.s32 0, %v408
  %v410 = vrot.slane %v405, %v409
  %v428 = vunpack.c.l.b16 %v389
  %v429 = vunpack.c.l.b16 %v390
  %v430 = vunpack.c.l.b16 %v391
  %v431 = vunpack.c.l.b16 %v392
  %v432 = vunpack.c.l.b16 %v393
  %v433 = vunpack.c.l.b16 %v394
  %v434 = vunpack.c.l.b16 %v395
  %v435 = vunpack.c.l.b16 %v396
  %v436 = vunpack.c.l.b16 %v397
  %v437 = vunpack.c.l.b16 %v398
  %v438 = vunpack.c.l.b16 %v399
  %v439 = vunpack.c.l.b16 %v400
  %v440 = vunpack.c.l.b16 %v401
  %v441 = vunpack.c.l.b16 %v402
  %v442 = vunpack.c.l.b16 %v403
  %v443 = vunpack.c.l.b16 %v404
  %v444 = vpack.c.b16 %v429, %v428
  %v445 = vpack.c.b16 %v431, %v430
  %v446 = vpack.c.b16 %v433, %v432
  %v447 = vpack.c.b16 %v435, %v434
  %v448 = vpack.c.b16 %v437, %v436
  %v449 = vpack.c.b16 %v439, %v438
  %v450 = vpack.c.b16 %v441, %v440
  %v451 = vpack.c.b16 %v443, %v442
  %468 = vrot.lane.b32.xlu0 %v213, 64
  %v469 = vpop.permute.xlu0 %468
  %470 = vrot.lane.b32.xlu0 %v214, 64
  %v471 = vpop.permute.xlu0 %470
  %472 = vrot.lane.b32.xlu0 %v215, 64
  %v473 = vpop.permute.xlu0 %472
  %474 = vrot.lane.b32.xlu0 %v216, 64
  %v475 = vpop.permute.xlu0 %474
  %476 = vrot.lane.b32.xlu0 %v217, 64
  %v477 = vpop.permute.xlu0 %476
  %478 = vrot.lane.b32.xlu0 %v218, 64
  %v479 = vpop.permute.xlu0 %478
  %480 = vrot.lane.b32.xlu0 %v219, 64
  %v481 = vpop.permute.xlu0 %480
  %482 = vrot.lane.b32.xlu0 %v220, 64
  %v483 = vpop.permute.xlu0 %482
  %492 = vmatprep.subr.bf16.mxu0 0
  %493 = vmatpush1.bf16.msra.mxu0 %v483
  %494 = vmatprep.subr.bf16.mxu0 0
  %495 = vmatpush1.bf16.msra.mxu0 %v481
  %496 = vmatprep.subr.bf16.mxu0 0
  %497 = vmatpush1.bf16.msra.mxu0 %v479
  %498 = vmatprep.subr.bf16.mxu0 0
  %499 = vmatpush1.bf16.msra.mxu0 %v477
  %500 = vmatprep.subr.bf16.mxu0 0
  %501 = vmatpush1.bf16.msra.mxu0 %v475
  %502 = vmatprep.subr.bf16.mxu0 0
  %503 = vmatpush1.bf16.msra.mxu0 %v473
  %504 = vmatprep.subr.bf16.mxu0 0
  %505 = vmatpush1.bf16.msra.mxu0 %v471
  %506 = vmatprep.subr.bf16.mxu0 0
  %507 = vmatpush1.bf16.msra.mxu0 %v469
  %508 = vmatprep.subr.bf16.mxu0 0
  %509 = vmatpush2.bf16.msra.mxu0 0
  %510 = vmatprep.subr.bf16.mxu0 0
  %511 = vmatpush2.bf16.msra.mxu0 0
  %512 = vmatprep.subr.bf16.mxu0 0
  %513 = vmatpush2.bf16.msra.mxu0 0
  %514 = vmatprep.subr.bf16.mxu0 0
  %515 = vmatpush2.bf16.msra.mxu0 0
  %516 = vmatprep.subr.bf16.mxu0 0
  %517 = vmatpush2.bf16.msra.mxu0 0
  %518 = vmatprep.subr.bf16.mxu0 0
  %519 = vmatpush2.bf16.msra.mxu0 0
  %520 = vmatprep.subr.bf16.mxu0 0
  %521 = vmatpush2.bf16.msra.mxu0 0
  %522 = vmatprep.subr.bf16.mxu0 0
  %523 = vmatpush2.bf16.msra.mxu0 0
  %524 = vmatprep.mubr.bf16.mxu0 0
  %525 = vmatmul.mubr.bf16.gmra.mxu0 %v444
  %v526 = vpop.f32.mrf.mxu0
  %v527 = vadd.f32 %v410, %v526
  %v528 = vpop.f32.mrf.mxu0
  %v529 = vpop.f32.mrf.mxu0
  %v530 = vadd.f32 %v410, %v529
  %v531 = vpop.f32.mrf.mxu0
  %532 = vmatprep.mubr.bf16.mxu0 0
  %533 = vmatmul.mubr.bf16.gmra.mxu0 %v445
  %v534 = vpop.f32.mrf.mxu0
  %v535 = vadd.f32 %v410, %v534
  %v536 = vpop.f32.mrf.mxu0
  %v537 = vpop.f32.mrf.mxu0
  %v538 = vadd.f32 %v410, %v537
  %v539 = vpop.f32.mrf.mxu0
  %540 = vmatprep.mubr.bf16.mxu0 0
  %541 = vmatmul.mubr.bf16.gmra.mxu0 %v446
  %v542 = vpop.f32.mrf.mxu0
  %v543 = vadd.f32 %v410, %v542
  %v544 = vpop.f32.mrf.mxu0
  %v545 = vpop.f32.mrf.mxu0
  %v546 = vadd.f32 %v410, %v545
  %v547 = vpop.f32.mrf.mxu0
  %548 = vmatprep.mubr.bf16.mxu0 0
  %549 = vmatmul.mubr.bf16.gmra.mxu0 %v447
  %v550 = vpop.f32.mrf.mxu0
  %v551 = vadd.f32 %v410, %v550
  %v552 = vpop.f32.mrf.mxu0
  %v553 = vpop.f32.mrf.mxu0
  %v554 = vadd.f32 %v410, %v553
  %v555 = vpop.f32.mrf.mxu0
  %556 = vmatprep.mubr.bf16.mxu0 0
  %557 = vmatmul.mubr.bf16.gmra.mxu0 %v448
  %v558 = vpop.f32.mrf.mxu0
  %v559 = vadd.f32 %v410, %v558
  %v560 = vpop.f32.mrf.mxu0
  %v561 = vpop.f32.mrf.mxu0
  %v562 = vadd.f32 %v410, %v561
  %v563 = vpop.f32.mrf.mxu0
  %564 = vmatprep.mubr.bf16.mxu0 0
  %565 = vmatmul.mubr.bf16.gmra.mxu0 %v449
  %v566 = vpop.f32.mrf.mxu0
  %v567 = vadd.f32 %v410, %v566
  %v568 = vpop.f32.mrf.mxu0
  %v569 = vpop.f32.mrf.mxu0
  %v570 = vadd.f32 %v410, %v569
  %v571 = vpop.f32.mrf.mxu0
  %572 = vmatprep.mubr.bf16.mxu0 0
  %573 = vmatmul.mubr.bf16.gmra.mxu0 %v450
  %v574 = vpop.f32.mrf.mxu0
  %v575 = vadd.f32 %v410, %v574
  %v576 = vpop.f32.mrf.mxu0
  %v577 = vpop.f32.mrf.mxu0
  %v578 = vadd.f32 %v410, %v577
  %v579 = vpop.f32.mrf.mxu0
  %580 = vmatprep.mubr.bf16.mxu0 0
  %581 = vmatmul.mubr.bf16.gmra.mxu0 %v451
  %v582 = vpop.f32.mrf.mxu0
  %v583 = vadd.f32 %v410, %v582
  %v584 = vpop.f32.mrf.mxu0
  %v585 = vpop.f32.mrf.mxu0
  %v586 = vadd.f32 %v410, %v585
  %v587 = vpop.f32.mrf.mxu0
  %588 = vdwg.mxu0
  %v589 = vmax.f32 %v327, 0.0
  %v590 = vmax.f32 %v330, 0.0
  %v591 = vmax.f32 %v335, 0.0
  %v592 = vmax.f32 %v338, 0.0
  %v593 = vmax.f32 %v343, 0.0
  %v594 = vmax.f32 %v346, 0.0
  %v595 = vmax.f32 %v351, 0.0
  %v596 = vmax.f32 %v354, 0.0
  %v597 = vmax.f32 %v359, 0.0
  %v598 = vmax.f32 %v362, 0.0
  %v599 = vmax.f32 %v367, 0.0
  %v600 = vmax.f32 %v370, 0.0
  %v601 = vmax.f32 %v375, 0.0
  %v602 = vmax.f32 %v378, 0.0
  %v603 = vmax.f32 %v383, 0.0
  %v604 = vmax.f32 %v386, 0.0
  %v605 = vmax.f32 %v527, 0.0
  %v606 = vmax.f32 %v530, 0.0
  %v607 = vmax.f32 %v535, 0.0
  %v608 = vmax.f32 %v538, 0.0
  %v609 = vmax.f32 %v543, 0.0
  %v610 = vmax.f32 %v546, 0.0
  %v611 = vmax.f32 %v551, 0.0
  %v612 = vmax.f32 %v554, 0.0
  %v613 = vmax.f32 %v559, 0.0
  %v614 = vmax.f32 %v562, 0.0
  %v615 = vmax.f32 %v567, 0.0
  %v616 = vmax.f32 %v570, 0.0
  %v617 = vmax.f32 %v575, 0.0
  %v618 = vmax.f32 %v578, 0.0
  %v619 = vmax.f32 %v583, 0.0
  %v620 = vmax.f32 %v586, 0.0
  %637 = vrot.lane.b32.xlu0 %v605, 64
  %v638 = vpop.permute.xlu0 %637
  %639 = vrot.lane.b32.xlu0 %v606, 64
  %v640 = vpop.permute.xlu0 %639
  %641 = vrot.lane.b32.xlu0 %v607, 64
  %v642 = vpop.permute.xlu0 %641
  %643 = vrot.lane.b32.xlu0 %v608, 64
  %v644 = vpop.permute.xlu0 %643
  %645 = vrot.lane.b32.xlu0 %v609, 64
  %v646 = vpop.permute.xlu0 %645
  %647 = vrot.lane.b32.xlu0 %v610, 64
  %v648 = vpop.permute.xlu0 %647
  %649 = vrot.lane.b32.xlu0 %v611, 64
  %v650 = vpop.permute.xlu0 %649
  %651 = vrot.lane.b32.xlu0 %v612, 64
  %v652 = vpop.permute.xlu0 %651
  %653 = vrot.lane.b32.xlu0 %v613, 64
  %v654 = vpop.permute.xlu0 %653
  %655 = vrot.lane.b32.xlu0 %v614, 64
  %v656 = vpop.permute.xlu0 %655
  %657 = vrot.lane.b32.xlu0 %v615, 64
  %v658 = vpop.permute.xlu0 %657
  %659 = vrot.lane.b32.xlu0 %v616, 64
  %v660 = vpop.permute.xlu0 %659
  %661 = vrot.lane.b32.xlu0 %v617, 64
  %v662 = vpop.permute.xlu0 %661
  %663 = vrot.lane.b32.xlu0 %v618, 64
  %v664 = vpop.permute.xlu0 %663
  %665 = vrot.lane.b32.xlu0 %v619, 64
  %v666 = vpop.permute.xlu0 %665
  %667 = vrot.lane.b32.xlu0 %v620, 64
  %v668 = vpop.permute.xlu0 %667
  %vm685 = vcmask 523264
  %v686 = vsel %vm685, %v589, %v638
  %v687 = vsel %vm685, %v590, %v640
  %v688 = vsel %vm685, %v591, %v642
  %v689 = vsel %vm685, %v592, %v644
  %v690 = vsel %vm685, %v593, %v646
  %v691 = vsel %vm685, %v594, %v648
  %v692 = vsel %vm685, %v595, %v650
  %v693 = vsel %vm685, %v596, %v652
  %v694 = vsel %vm685, %v597, %v654
  %v695 = vsel %vm685, %v598, %v656
  %v696 = vsel %vm685, %v599, %v658
  %v697 = vsel %vm685, %v600, %v660
  %v698 = vsel %vm685, %v601, %v662
  %v699 = vsel %vm685, %v602, %v664
  %v700 = vsel %vm685, %v603, %v666
  %v701 = vsel %vm685, %v604, %v668
  %v702 = vpack.c.bf16 %v687, %v686
  %v703 = vpack.c.bf16 %v689, %v688
  %v704 = vpack.c.bf16 %v691, %v690
  %v705 = vpack.c.bf16 %v693, %v692
  %v706 = vpack.c.bf16 %v695, %v694
  %v707 = vpack.c.bf16 %v697, %v696
  %v708 = vpack.c.bf16 %v699, %v698
  %v709 = vpack.c.bf16 %v701, %v700
  %v710 = vld [vmem:[%s4] sm:$0xf]
  %v711 = vld [vmem:[%s4 + $0x4] sm:$0xf]
  %v712 = vld [vmem:[%s4 + $0x8] sm:$0xf]
  %v713 = vld [vmem:[%s4 + $0xc] sm:$0xf]
  %v714 = vld [vmem:[%s4 + $0x10] sm:$0xf]
  %v715 = vld [vmem:[%s4 + $0x14] sm:$0xf]
  %v716 = vld [vmem:[%s4 + $0x18] sm:$0xf]
  %v717 = vld [vmem:[%s4 + $0x1c] sm:$0xf]
  %v718 = vld [vmem:[%s4 + $0x20] sm:$0xf]
  %v719 = vld [vmem:[%s4 + $0x24] sm:$0xf]
  %v720 = vld [vmem:[%s4 + $0x28] sm:$0xf]
  %v721 = vld [vmem:[%s4 + $0x2c] sm:$0xf]
  %v722 = vld [vmem:[%s4 + $0x30] sm:$0xf]
  %v723 = vld [vmem:[%s4 + $0x34] sm:$0xf]
  %v724 = vld [vmem:[%s4 + $0x38] sm:$0xf]
  %v725 = vld [vmem:[%s4 + $0x3c] sm:$0xf]
  %v726 = vld [vmem:[%s5] sm:$0x1]
  %v728 = vlaneseq
  %v729 = vshrl.u32 %v728, 7
  %v730 = vsub.s32 0, %v729
  %v731 = vrot.slane %v726, %v730
  %v749 = vunpack.c.l.b16 %v710
  %v750 = vunpack.c.l.b16 %v711
  %v751 = vunpack.c.l.b16 %v712
  %v752 = vunpack.c.l.b16 %v713
  %v753 = vunpack.c.l.b16 %v714
  %v754 = vunpack.c.l.b16 %v715
  %v755 = vunpack.c.l.b16 %v716
  %v756 = vunpack.c.l.b16 %v717
  %v757 = vunpack.c.l.b16 %v718
  %v758 = vunpack.c.l.b16 %v719
  %v759 = vunpack.c.l.b16 %v720
  %v760 = vunpack.c.l.b16 %v721
  %v761 = vunpack.c.l.b16 %v722
  %v762 = vunpack.c.l.b16 %v723
  %v763 = vunpack.c.l.b16 %v724
  %v764 = vunpack.c.l.b16 %v725
  %v765 = vpack.c.b16 %v750, %v749
  %v766 = vpack.c.b16 %v752, %v751
  %v767 = vpack.c.b16 %v754, %v753
  %v768 = vpack.c.b16 %v756, %v755
  %v769 = vpack.c.b16 %v758, %v757
  %v770 = vpack.c.b16 %v760, %v759
  %v771 = vpack.c.b16 %v762, %v761
  %v772 = vpack.c.b16 %v764, %v763
  %781 = vmatprep.subr.bf16.mxu0 0
  %782 = vmatpush1.bf16.msra.mxu0 %v772
  %783 = vmatprep.subr.bf16.mxu0 0
  %784 = vmatpush1.bf16.msra.mxu0 %v771
  %785 = vmatprep.subr.bf16.mxu0 0
  %786 = vmatpush1.bf16.msra.mxu0 %v770
  %787 = vmatprep.subr.bf16.mxu0 0
  %788 = vmatpush1.bf16.msra.mxu0 %v769
  %789 = vmatprep.subr.bf16.mxu0 0
  %790 = vmatpush1.bf16.msra.mxu0 %v768
  %791 = vmatprep.subr.bf16.mxu0 0
  %792 = vmatpush1.bf16.msra.mxu0 %v767
  %793 = vmatprep.subr.bf16.mxu0 0
  %794 = vmatpush1.bf16.msra.mxu0 %v766
  %795 = vmatprep.subr.bf16.mxu0 0
  %796 = vmatpush1.bf16.msra.mxu0 %v765
  %797 = vmatprep.subr.bf16.mxu0 0
  %798 = vmatpush2.bf16.msra.mxu0 0
  %799 = vmatprep.subr.bf16.mxu0 0
  %800 = vmatpush2.bf16.msra.mxu0 0
  %801 = vmatprep.subr.bf16.mxu0 0
  %802 = vmatpush2.bf16.msra.mxu0 0
  %803 = vmatprep.subr.bf16.mxu0 0
  %804 = vmatpush2.bf16.msra.mxu0 0
  %805 = vmatprep.subr.bf16.mxu0 0
  %806 = vmatpush2.bf16.msra.mxu0 0
  %807 = vmatprep.subr.bf16.mxu0 0
  %808 = vmatpush2.bf16.msra.mxu0 0
  %809 = vmatprep.subr.bf16.mxu0 0
  %810 = vmatpush2.bf16.msra.mxu0 0
  %811 = vmatprep.subr.bf16.mxu0 0
  %812 = vmatpush2.bf16.msra.mxu0 0
  %813 = vmatprep.mubr.bf16.mxu0 0
  %814 = vmatmul.mubr.bf16.gmra.mxu0 %v702
  %v815 = vpop.f32.mrf.mxu0
  %v816 = vadd.f32 %v731, %v815
  %v817 = vpop.f32.mrf.mxu0
  %v818 = vpop.f32.mrf.mxu0
  %v819 = vadd.f32 %v731, %v818
  %v820 = vpop.f32.mrf.mxu0
  %821 = vmatprep.mubr.bf16.mxu0 0
  %822 = vmatmul.mubr.bf16.gmra.mxu0 %v703
  %v823 = vpop.f32.mrf.mxu0
  %v824 = vadd.f32 %v731, %v823
  %v825 = vpop.f32.mrf.mxu0
  %v826 = vpop.f32.mrf.mxu0
  %v827 = vadd.f32 %v731, %v826
  %v828 = vpop.f32.mrf.mxu0
  %829 = vmatprep.mubr.bf16.mxu0 0
  %830 = vmatmul.mubr.bf16.gmra.mxu0 %v704
  %v831 = vpop.f32.mrf.mxu0
  %v832 = vadd.f32 %v731, %v831
  %v833 = vpop.f32.mrf.mxu0
  %v834 = vpop.f32.mrf.mxu0
  %v835 = vadd.f32 %v731, %v834
  %v836 = vpop.f32.mrf.mxu0
  %837 = vmatprep.mubr.bf16.mxu0 0
  %838 = vmatmul.mubr.bf16.gmra.mxu0 %v705
  %v839 = vpop.f32.mrf.mxu0
  %v840 = vadd.f32 %v731, %v839
  %v841 = vpop.f32.mrf.mxu0
  %v842 = vpop.f32.mrf.mxu0
  %v843 = vadd.f32 %v731, %v842
  %v844 = vpop.f32.mrf.mxu0
  %845 = vmatprep.mubr.bf16.mxu0 0
  %846 = vmatmul.mubr.bf16.gmra.mxu0 %v706
  %v847 = vpop.f32.mrf.mxu0
  %v848 = vadd.f32 %v731, %v847
  %v849 = vpop.f32.mrf.mxu0
  %v850 = vpop.f32.mrf.mxu0
  %v851 = vadd.f32 %v731, %v850
  %v852 = vpop.f32.mrf.mxu0
  %853 = vmatprep.mubr.bf16.mxu0 0
  %854 = vmatmul.mubr.bf16.gmra.mxu0 %v707
  %v855 = vpop.f32.mrf.mxu0
  %v856 = vadd.f32 %v731, %v855
  %v857 = vpop.f32.mrf.mxu0
  %v858 = vpop.f32.mrf.mxu0
  %v859 = vadd.f32 %v731, %v858
  %v860 = vpop.f32.mrf.mxu0
  %861 = vmatprep.mubr.bf16.mxu0 0
  %862 = vmatmul.mubr.bf16.gmra.mxu0 %v708
  %v863 = vpop.f32.mrf.mxu0
  %v864 = vadd.f32 %v731, %v863
  %v865 = vpop.f32.mrf.mxu0
  %v866 = vpop.f32.mrf.mxu0
  %v867 = vadd.f32 %v731, %v866
  %v868 = vpop.f32.mrf.mxu0
  %869 = vmatprep.mubr.bf16.mxu0 0
  %870 = vmatmul.mubr.bf16.gmra.mxu0 %v709
  %v871 = vpop.f32.mrf.mxu0
  %v872 = vadd.f32 %v731, %v871
  %v873 = vpop.f32.mrf.mxu0
  %v874 = vpop.f32.mrf.mxu0
  %v875 = vadd.f32 %v731, %v874
  %v876 = vpop.f32.mrf.mxu0
  %877 = vdwg.mxu0
  %v878 = vmax.f32 %v816, 0.0
  %v879 = vmax.f32 %v819, 0.0
  %v880 = vmax.f32 %v824, 0.0
  %v881 = vmax.f32 %v827, 0.0
  %v882 = vmax.f32 %v832, 0.0
  %v883 = vmax.f32 %v835, 0.0
  %v884 = vmax.f32 %v840, 0.0
  %v885 = vmax.f32 %v843, 0.0
  %v886 = vmax.f32 %v848, 0.0
  %v887 = vmax.f32 %v851, 0.0
  %v888 = vmax.f32 %v856, 0.0
  %v889 = vmax.f32 %v859, 0.0
  %v890 = vmax.f32 %v864, 0.0
  %v891 = vmax.f32 %v867, 0.0
  %v892 = vmax.f32 %v872, 0.0
  %v893 = vmax.f32 %v875, 0.0
  %v894 = vpack.c.bf16 %v879, %v878
  %v895 = vpack.c.bf16 %v881, %v880
  %v896 = vpack.c.bf16 %v883, %v882
  %v897 = vpack.c.bf16 %v885, %v884
  %v898 = vpack.c.bf16 %v887, %v886
  %v899 = vpack.c.bf16 %v889, %v888
  %v900 = vpack.c.bf16 %v891, %v890
  %v901 = vpack.c.bf16 %v893, %v892
  %v910 = vunpack.c.l.b16 %v894
  %v911 = vunpack.c.h.b16 %v894
  %v912 = vunpack.c.l.b16 %v895
  %v913 = vunpack.c.h.b16 %v895
  %v914 = vunpack.c.l.b16 %v896
  %v915 = vunpack.c.h.b16 %v896
  %v916 = vunpack.c.l.b16 %v897
  %v917 = vunpack.c.h.b16 %v897
  %v918 = vunpack.c.l.b16 %v898
  %v919 = vunpack.c.h.b16 %v898
  %v920 = vunpack.c.l.b16 %v899
  %v921 = vunpack.c.h.b16 %v899
  %v922 = vunpack.c.l.b16 %v900
  %v923 = vunpack.c.h.b16 %v900
  %v924 = vunpack.c.l.b16 %v901
  %v925 = vunpack.c.h.b16 %v901
  %v926 = vpack.c.b16 %v910, %v910
  %v927 = vpack.c.b16 %v911, %v911
  %v928 = vpack.c.b16 %v912, %v912
  %v929 = vpack.c.b16 %v913, %v913
  %v930 = vpack.c.b16 %v914, %v914
  %v931 = vpack.c.b16 %v915, %v915
  %v932 = vpack.c.b16 %v916, %v916
  %v933 = vpack.c.b16 %v917, %v917
  %v934 = vpack.c.b16 %v918, %v918
  %v935 = vpack.c.b16 %v919, %v919
  %v936 = vpack.c.b16 %v920, %v920
  %v937 = vpack.c.b16 %v921, %v921
  %v938 = vpack.c.b16 %v922, %v922
  %v939 = vpack.c.b16 %v923, %v923
  %v940 = vpack.c.b16 %v924, %v924
  %v941 = vpack.c.b16 %v925, %v925
  %vm958 = vcmask 519168
  %959 = vst.msk [vmem:[%s8] sm:$0xf] %vm958, %v926
  %960 = vst.msk [vmem:[%s8 + $0x4] sm:$0xf] %vm958, %v927
  %961 = vst.msk [vmem:[%s8 + $0x8] sm:$0xf] %vm958, %v928
  %962 = vst.msk [vmem:[%s8 + $0xc] sm:$0xf] %vm958, %v929
  %963 = vst.msk [vmem:[%s8 + $0x10] sm:$0xf] %vm958, %v930
  %964 = vst.msk [vmem:[%s8 + $0x14] sm:$0xf] %vm958, %v931
  %965 = vst.msk [vmem:[%s8 + $0x18] sm:$0xf] %vm958, %v932
  %966 = vst.msk [vmem:[%s8 + $0x1c] sm:$0xf] %vm958, %v933
  %967 = vst.msk [vmem:[%s8 + $0x20] sm:$0xf] %vm958, %v934
  %968 = vst.msk [vmem:[%s8 + $0x24] sm:$0xf] %vm958, %v935
  %969 = vst.msk [vmem:[%s8 + $0x28] sm:$0xf] %vm958, %v936
  %970 = vst.msk [vmem:[%s8 + $0x2c] sm:$0xf] %vm958, %v937
  %971 = vst.msk [vmem:[%s8 + $0x30] sm:$0xf] %vm958, %v938
  %972 = vst.msk [vmem:[%s8 + $0x34] sm:$0xf] %vm958, %v939
  %973 = vst.msk [vmem:[%s8 + $0x38] sm:$0xf] %vm958, %v940
  %974 = vst.msk [vmem:[%s8 + $0x3c] sm:$0xf] %vm958, %v941
  // Predicated region
  $region34: #{fault_gnn_forward.2} parent=0 // pred_check
    _
  $region35: #{fault_gnn_forward.2} parent=0 // pred_check_branch
    %976 = sbr.rel (0) target = $region37
  $region36: #{fault_gnn_forward.2} parent=0 // pred_region
    _
  $region37: #{fault_gnn_forward.2} parent=0 // pred_fallthru
    _
  // Predicated region
  $region38: #{fault_gnn_forward.2} parent=0 // pred_check
    _
  $region39: #{fault_gnn_forward.2} parent=0 // pred_check_branch
    %978 = sbr.rel (0) target = $region41
  $region40: #{fault_gnn_forward.2} parent=0 // pred_region
    _
  $region41: #{fault_gnn_forward.2} parent=0 // pred_fallthru
    _

</llo_original>
